<compile_context>
chip_gen: v5e
topology: v5e:2x2
jax: 0.10.0
libtpu: 0.0.40
codegen_flags: <defaults>
</compile_context>

<pallas_src>
import functools

import jax
import jax.numpy as jnp
from jax import lax
from jax.experimental import pallas as pl
from jax.experimental.pallas import tpu as pltpu


# ----------------------------------------------------------------------------
# Pallas kernel: fused head for one batch element (channels-first, flat-spatial).
# ----------------------------------------------------------------------------
def head_kernel(x_ref, w1_ref, b1_ref, w2_ref, b2_ref, mw_ref, mh_ref, o_ref, *, H, W):
    """
    x_ref  : (Cin, H*W)           raw input image, spatially flattened (no HBM pad)
    w1_ref : (Cmid, 9*Cin)        3x3 conv taps, BN scale folded in, (kh,kw,cin) order
    b1_ref : (Cmid, 1)            folded BN bias (conv1 bias included)
    w2_ref : (Cnum, Cmid)         1x1 conv weight
    b2_ref : (Cnum, 1)            1x1 conv bias
    mw_ref : (H*W,  H*Wo)         width-pass matrix   kron(I_H , Wx^T)
    mh_ref : (H*Wo, Ho*Wo)        height-pass matrix  kron(Wy^T, I_Wo)
    o_ref  : (Cnum, Ho*Wo)        lane-dense output block (NCHW slice, flattened)
    """
    HW = H * W
    cin = x_ref.shape[0]

    x = x_ref[...]                                              # (Cin, HW)

    # --- edge masks (hoisted; identical for every kh) --------------------------------
    col = lax.broadcasted_iota(jnp.int32, (1, HW), 1) % W
    mask_l = col == 0                                           # conv width-pad, left
    mask_r = col == (W - 1)                                     # conv width-pad, right

    # --- zero-padded flat view built in VMEM (no HBM pad round trip) -----------------
    zpad = jnp.zeros((cin, W + 1), jnp.float32)
    xz = jnp.concatenate([zpad, x, zpad], axis=1)               # (Cin, HW + 2W + 2)

    # --- 3x3 conv (pad=1) as ONE K=9*Cin matmul ---------------------------------------
    taps = []
    for kh in range(3):
        for kw in range(3):
            off = kh * W + kw
            xt = xz[:, off:off + HW]                            # (Cin, HW)
            if kw == 0:
                xt = jnp.where(mask_l, 0.0, xt)
            elif kw == 2:
                xt = jnp.where(mask_r, 0.0, xt)
            taps.append(xt)
    xcat = jnp.concatenate(taps, axis=0)                        # (9*Cin, HW)

    h = jnp.dot(w1_ref[...], xcat, preferred_element_type=jnp.float32)   # (Cmid, HW)

    # --- folded BatchNorm (scale already in weights) + ReLU ---------------------------
    h = jnp.maximum(h + b1_ref[...], 0.0)

    # --- 1x1 conv ----------------------------------------------------------------------
    y = jnp.dot(w2_ref[...], h, preferred_element_type=jnp.float32) + b2_ref[...]
    # y: (Cnum, HW)

    # --- separable bilinear resize, two lane-dense matmuls ----------------------------
    z = jnp.dot(y, mw_ref[...], preferred_element_type=jnp.float32)      # (Cnum, H*Wo)
    o = jnp.dot(z, mh_ref[...], preferred_element_type=jnp.float32)      # (Cnum, Ho*Wo)

    o_ref[...] = o.astype(o_ref.dtype)


# ----------------------------------------------------------------------------
# Helpers (parameter / layout glue in plain JAX)
# ----------------------------------------------------------------------------
def interp_matrix(out_size, in_size):
    """Dense 1-D bilinear interpolation matrix matching PyTorch align_corners=False."""
    scale = in_size / out_size
    dst = jnp.arange(out_size, dtype=jnp.float32)
    src = scale * (dst + 0.5) - 0.5
    src = jnp.maximum(src, 0.0)                    # PyTorch clamps negative source coords
    i0 = jnp.floor(src).astype(jnp.int32)
    i0 = jnp.minimum(i0, in_size - 1)
    i1 = jnp.minimum(i0 + 1, in_size - 1)
    w1 = src - i0.astype(jnp.float32)
    w0 = 1.0 - w1
    m = (jax.nn.one_hot(i0, in_size, dtype=jnp.float32) * w0[:, None]
         + jax.nn.one_hot(i1, in_size, dtype=jnp.float32) * w1[:, None])
    return m                                       # (out_size, in_size)


@functools.partial(jax.jit, static_argnames=("img_size",))
def head_forward(x_nchw, params, img_size):
    """PyTorch-equivalent forward. x_nchw: (N, Cin, H, W) f32 -> (N, Cnum, Ho, Wo)."""
    w1, b1, gamma, beta, run_mean, run_var, w2, b2 = params
    n, cin, h, w = x_nchw.shape
    cmid = w1.shape[0]
    cnum = w2.shape[0]
    ho, wo = img_size
    eps = 1e-5

    # --- parameter folding (glue) ---
    bn_scale = gamma / jnp.sqrt(run_var + eps)                       # (Cmid,)
    bn_bias = (b1 - run_mean) * bn_scale + beta                      # conv1 bias folded
    # BN scale folded into the conv weights; taps flattened to a single K=9*Cin matrix
    # in (kh, kw, cin) order to match the in-kernel tap concatenation.
    w1_folded = w1 * bn_scale[:, None, None, None]                   # (Cmid, Cin, 3, 3)
    w1cat = jnp.transpose(w1_folded, (0, 2, 3, 1)).reshape(cmid, 9 * cin)
    w2mat = w2.reshape(cnum, cmid)                                   # (Cnum, Cmid)

    # separable bilinear resize as two flat matmuls (right-multiplication form):
    wx = interp_matrix(wo, w)                                        # (Wo, W)
    wy = interp_matrix(ho, h)                                        # (Ho, H)
    mw = jnp.kron(jnp.eye(h, dtype=jnp.float32), wx.T)               # (H*W,  H*Wo)
    mh = jnp.kron(wy.T, jnp.eye(wo, dtype=jnp.float32))              # (H*Wo, Ho*Wo)

    # raw flattened input -- no pad materialization, reshape is metadata-only
    xflat = x_nchw.reshape(n, cin, h * w)                            # (N, Cin, H*W)

    kernel = functools.partial(head_kernel, H=h, W=w)

    out = pl.pallas_call(
        kernel,
        out_shape=jax.ShapeDtypeStruct((n, cnum, ho * wo), jnp.float32),
        grid_spec=pltpu.PrefetchScalarGridSpec(
            num_scalar_prefetch=0,
            grid=(n,),
            in_specs=[
                pl.BlockSpec((pl.Squeezed(), cin, h * w), lambda i: (i, 0, 0)),
                pl.BlockSpec((cmid, 9 * cin), lambda i: (0, 0)),
                pl.BlockSpec((cmid, 1), lambda i: (0, 0)),
                pl.BlockSpec((cnum, cmid), lambda i: (0, 0)),
                pl.BlockSpec((cnum, 1), lambda i: (0, 0)),
                pl.BlockSpec((h * w, h * wo), lambda i: (0, 0)),
                pl.BlockSpec((h * wo, ho * wo), lambda i: (0, 0)),
            ],
            out_specs=pl.BlockSpec((pl.Squeezed(), cnum, ho * wo),
                                   lambda i: (i, 0, 0)),
        ),
        compiler_params=pltpu.CompilerParams(
            dimension_semantics=("parallel",),
        ),
    )(xflat, w1cat, bn_bias.reshape(cmid, 1), w2mat, b2.reshape(cnum, 1), mw, mh)

    return out.reshape(n, cnum, ho, wo)            # contiguous reshape back to NCHW


# ----------------------------------------------------------------------------
# Pure-JAX reference (same math, no Pallas) for a correctness cross-check.
# ----------------------------------------------------------------------------
def reference_forward(x_nchw, params, img_size):
    w1, b1, gamma, beta, run_mean, run_var, w2, b2 = params
    eps = 1e-5
    h_in, w_in = x_nchw.shape[2], x_nchw.shape[3]
    ho, wo = img_size
    y = lax.conv_general_dilated(
        x_nchw, w1, (1, 1), ((1, 1), (1, 1)),
        dimension_numbers=("NCHW", "OIHW", "NCHW")) + b1[None, :, None, None]
    y = (y - run_mean[None, :, None, None]) / jnp.sqrt(run_var + eps)[None, :, None, None]
    y = y * gamma[None, :, None, None] + beta[None, :, None, None]
    y = jnp.maximum(y, 0.0)
    y = lax.conv_general_dilated(
        y, w2, (1, 1), "VALID",
        dimension_numbers=("NCHW", "OIHW", "NCHW")) + b2[None, :, None, None]
    wy = interp_matrix(ho, h_in)
    wx = interp_matrix(wo, w_in)
    y = jnp.einsum("oh,nchw->ncow", wy, y)
    y = jnp.einsum("pw,ncow->ncop", wx, y)
    return y


if __name__ == "__main__":
    # Small config consistent with HeadModule(in_channels, inter_channels, class_num, img_size)
    in_channels, inter_channels, class_num = 4, 32, 5
    H = W = 16
    img_size = (32, 32)
    N = 2

    key = jax.random.PRNGKey(0)
    ks = jax.random.split(key, 9)
    w1 = jax.random.normal(ks[0], (inter_channels, in_channels, 3, 3), jnp.float32) * 0.1
    b1 = jax.random.normal(ks[1], (inter_channels,), jnp.float32) * 0.1
    gamma = jax.random.uniform(ks[2], (inter_channels,), jnp.float32, 0.5, 1.5)
    beta = jax.random.normal(ks[3], (inter_channels,), jnp.float32) * 0.1
    run_mean = jax.random.normal(ks[4], (inter_channels,), jnp.float32) * 0.1
    run_var = jax.random.uniform(ks[5], (inter_channels,), jnp.float32, 0.5, 1.5)
    w2 = jax.random.normal(ks[6], (class_num, inter_channels, 1, 1), jnp.float32) * 0.1
    b2 = jax.random.normal(ks[7], (class_num,), jnp.float32) * 0.1
    params = (w1, b1, gamma, beta, run_mean, run_var, w2, b2)

    x = jax.random.normal(ks[8], (N, in_channels, H, W), jnp.float32)

    out = jax.block_until_ready(head_forward(x, params, img_size))
    ref = jax.block_until_ready(reference_forward(x, params, img_size))

    assert out.shape == (N, class_num, img_size[0], img_size[1]), out.shape
    max_err = float(jnp.max(jnp.abs(out - ref)))
    assert jnp.allclose(out, ref, rtol=1e-3, atol=1e-3), max_err

    print("KERNEL_OK")
</pallas_src>

<mosaic_0001>
module attributes {stable_mosaic.version = 11 : i64} {
  func.func @head_kernel(%arg0: i32, %arg1: memref<1x4x256xf32, #tpu.memory_space<vmem>>, %arg2: memref<32x36xf32, #tpu.memory_space<vmem>>, %arg3: memref<32x1xf32, #tpu.memory_space<vmem>>, %arg4: memref<5x32xf32, #tpu.memory_space<vmem>>, %arg5: memref<5x1xf32, #tpu.memory_space<vmem>>, %arg6: memref<256x512xf32, #tpu.memory_space<vmem>>, %arg7: memref<512x1024xf32, #tpu.memory_space<vmem>>, %arg8: memref<1x5x1024xf32, #tpu.memory_space<vmem>>) attributes {dimension_semantics = [#tpu.dimension_semantics<parallel>], iteration_bounds = array<i64: 2>, scalar_prefetch = 0 : i64, scratch_operands = 0 : i64, tpu.core_type = #tpu.core_type<tc>, window_params = [{transform_indices = @transform_0, window_bounds = array<i64: 1, 4, 256>}, {pipeline_mode = #tpu.pipeline_mode<synchronous>, transform_indices = @transform_1, window_bounds = array<i64: 32, 36>}, {pipeline_mode = #tpu.pipeline_mode<synchronous>, transform_indices = @transform_2, window_bounds = array<i64: 32, 1>}, {pipeline_mode = #tpu.pipeline_mode<synchronous>, transform_indices = @transform_3, window_bounds = array<i64: 5, 32>}, {pipeline_mode = #tpu.pipeline_mode<synchronous>, transform_indices = @transform_4, window_bounds = array<i64: 5, 1>}, {pipeline_mode = #tpu.pipeline_mode<synchronous>, transform_indices = @transform_5, window_bounds = array<i64: 256, 512>}, {pipeline_mode = #tpu.pipeline_mode<synchronous>, transform_indices = @transform_6, window_bounds = array<i64: 512, 1024>}, {transform_indices = @transform_7, window_bounds = array<i64: 1, 5, 1024>}]} {
    %c0 = arith.constant 0 : index
    %c0_0 = arith.constant 0 : index
    %c0_1 = arith.constant 0 : index
    %0 = vector.load %arg1[%c0, %c0_0, %c0_1] : memref<1x4x256xf32, #tpu.memory_space<vmem>>, vector<1x4x256xf32>
    %1 = vector.shape_cast %0 : vector<1x4x256xf32> to vector<4x256xf32>
    %2 = tpu.iota {dimensions = array<i32: 1>} : vector<1x256xi32>
    %c16_i32 = arith.constant 16 : i32
    %c0_i32 = arith.constant 0 : i32
    %3 = arith.cmpi eq, %c16_i32, %c0_i32 : i32
    %c1_i32 = arith.constant 1 : i32
    %4 = arith.select %3, %c1_i32, %c16_i32 : i32
    %5 = vector.broadcast %4 : i32 to vector<1x256xi32>
    %6 = arith.remsi %2, %5 : vector<1x256xi32>
    %c0_i32_2 = arith.constant 0 : i32
    %7 = vector.broadcast %c0_i32_2 : i32 to vector<1x256xi32>
    %8 = arith.cmpi ne, %6, %7 : vector<1x256xi32>
    %c0_i32_3 = arith.constant 0 : i32
    %9 = vector.broadcast %c0_i32_3 : i32 to vector<1x256xi32>
    %10 = arith.cmpi slt, %6, %9 : vector<1x256xi32>
    %c0_i32_4 = arith.constant 0 : i32
    %11 = arith.cmpi slt, %4, %c0_i32_4 : i32
    %12 = vector.broadcast %11 : i1 to vector<1x256xi1>
    %13 = vector.broadcast %12 : vector<1x256xi1> to vector<1x256xi1>
    %14 = arith.xori %10, %13 : vector<1x256xi1>
    %15 = arith.andi %14, %8 : vector<1x256xi1>
    %16 = vector.broadcast %4 : i32 to vector<1x256xi32>
    %17 = arith.addi %6, %16 : vector<1x256xi32>
    %18 = arith.select %15, %17, %6 : vector<1x256xi1>, vector<1x256xi32>
    %c0_i32_5 = arith.constant 0 : i32
    %19 = vector.broadcast %c0_i32_5 : i32 to vector<1x256xi32>
    %20 = arith.cmpi eq, %18, %19 : vector<1x256xi32>
    %c15_i32 = arith.constant 15 : i32
    %21 = vector.broadcast %c15_i32 : i32 to vector<1x256xi32>
    %22 = arith.cmpi eq, %18, %21 : vector<1x256xi32>
    %cst = arith.constant 0.000000e+00 : f32
    %23 = vector.broadcast %cst : f32 to vector<4x17xf32>
    %24 = tpu.concatenate %23, %1, %23 in 1 : vector<4x17xf32>, vector<4x256xf32>, vector<4x17xf32> -> vector<4x290xf32>
    %25 = vector.extract_strided_slice %24 {offsets = [0, 0], sizes = [4, 256], strides = [1, 1]} : vector<4x290xf32> to vector<4x256xf32>
    %cst_6 = arith.constant 0.000000e+00 : f32
    %26 = vector.shape_cast %20 : vector<1x256xi1> to vector<1x256xi1>
    %27 = vector.broadcast %26 : vector<1x256xi1> to vector<4x256xi1>
    %28 = vector.broadcast %cst_6 : f32 to vector<4x256xf32>
    %29 = arith.select %27, %28, %25 : vector<4x256xi1>, vector<4x256xf32>
    %30 = vector.extract_strided_slice %24 {offsets = [0, 1], sizes = [4, 256], strides = [1, 1]} : vector<4x290xf32> to vector<4x256xf32>
    %31 = vector.extract_strided_slice %24 {offsets = [0, 2], sizes = [4, 256], strides = [1, 1]} : vector<4x290xf32> to vector<4x256xf32>
    %cst_7 = arith.constant 0.000000e+00 : f32
    %32 = vector.shape_cast %22 : vector<1x256xi1> to vector<1x256xi1>
    %33 = vector.broadcast %32 : vector<1x256xi1> to vector<4x256xi1>
    %34 = vector.broadcast %cst_7 : f32 to vector<4x256xf32>
    %35 = arith.select %33, %34, %31 : vector<4x256xi1>, vector<4x256xf32>
    %36 = vector.extract_strided_slice %24 {offsets = [0, 16], sizes = [4, 256], strides = [1, 1]} : vector<4x290xf32> to vector<4x256xf32>
    %cst_8 = arith.constant 0.000000e+00 : f32
    %37 = vector.shape_cast %20 : vector<1x256xi1> to vector<1x256xi1>
    %38 = vector.broadcast %37 : vector<1x256xi1> to vector<4x256xi1>
    %39 = vector.broadcast %cst_8 : f32 to vector<4x256xf32>
    %40 = arith.select %38, %39, %36 : vector<4x256xi1>, vector<4x256xf32>
    %41 = vector.extract_strided_slice %24 {offsets = [0, 17], sizes = [4, 256], strides = [1, 1]} : vector<4x290xf32> to vector<4x256xf32>
    %42 = vector.extract_strided_slice %24 {offsets = [0, 18], sizes = [4, 256], strides = [1, 1]} : vector<4x290xf32> to vector<4x256xf32>
    %cst_9 = arith.constant 0.000000e+00 : f32
    %43 = vector.shape_cast %22 : vector<1x256xi1> to vector<1x256xi1>
    %44 = vector.broadcast %43 : vector<1x256xi1> to vector<4x256xi1>
    %45 = vector.broadcast %cst_9 : f32 to vector<4x256xf32>
    %46 = arith.select %44, %45, %42 : vector<4x256xi1>, vector<4x256xf32>
    %47 = vector.extract_strided_slice %24 {offsets = [0, 32], sizes = [4, 256], strides = [1, 1]} : vector<4x290xf32> to vector<4x256xf32>
    %cst_10 = arith.constant 0.000000e+00 : f32
    %48 = vector.shape_cast %20 : vector<1x256xi1> to vector<1x256xi1>
    %49 = vector.broadcast %48 : vector<1x256xi1> to vector<4x256xi1>
    %50 = vector.broadcast %cst_10 : f32 to vector<4x256xf32>
    %51 = arith.select %49, %50, %47 : vector<4x256xi1>, vector<4x256xf32>
    %52 = vector.extract_strided_slice %24 {offsets = [0, 33], sizes = [4, 256], strides = [1, 1]} : vector<4x290xf32> to vector<4x256xf32>
    %53 = vector.extract_strided_slice %24 {offsets = [0, 34], sizes = [4, 256], strides = [1, 1]} : vector<4x290xf32> to vector<4x256xf32>
    %cst_11 = arith.constant 0.000000e+00 : f32
    %54 = vector.shape_cast %22 : vector<1x256xi1> to vector<1x256xi1>
    %55 = vector.broadcast %54 : vector<1x256xi1> to vector<4x256xi1>
    %56 = vector.broadcast %cst_11 : f32 to vector<4x256xf32>
    %57 = arith.select %55, %56, %53 : vector<4x256xi1>, vector<4x256xf32>
    %58 = tpu.concatenate %29, %30, %35, %40, %41, %46, %51, %52, %57 in 0 : vector<4x256xf32>, vector<4x256xf32>, vector<4x256xf32>, vector<4x256xf32>, vector<4x256xf32>, vector<4x256xf32>, vector<4x256xf32>, vector<4x256xf32>, vector<4x256xf32> -> vector<36x256xf32>
    %c0_12 = arith.constant 0 : index
    %c0_13 = arith.constant 0 : index
    %59 = vector.load %arg2[%c0_12, %c0_13] : memref<32x36xf32, #tpu.memory_space<vmem>>, vector<32x36xf32>
    %cst_14 = arith.constant dense<0.000000e+00> : vector<32x256xf32>
    %60 = tpu.matmul %59, %58, %cst_14 {dimension_numbers = #tpu.dot_dimension_numbers<[1], [0], [0], [1], [0, 0, 1, 1], [], []>} : vector<32x36xf32>, vector<36x256xf32>, vector<32x256xf32> -> vector<32x256xf32>
    %c0_15 = arith.constant 0 : index
    %c0_16 = arith.constant 0 : index
    %61 = vector.load %arg3[%c0_15, %c0_16] : memref<32x1xf32, #tpu.memory_space<vmem>>, vector<32x1xf32>
    %62 = vector.broadcast %61 : vector<32x1xf32> to vector<32x256xf32>
    %63 = arith.addf %60, %62 : vector<32x256xf32>
    %cst_17 = arith.constant 0.000000e+00 : f32
    %64 = vector.broadcast %cst_17 : f32 to vector<32x256xf32>
    %65 = arith.maximumf %63, %64 : vector<32x256xf32>
    %c0_18 = arith.constant 0 : index
    %c0_19 = arith.constant 0 : index
    %66 = vector.load %arg4[%c0_18, %c0_19] : memref<5x32xf32, #tpu.memory_space<vmem>>, vector<5x32xf32>
    %cst_20 = arith.constant dense<0.000000e+00> : vector<5x256xf32>
    %67 = tpu.matmul %66, %65, %cst_20 {dimension_numbers = #tpu.dot_dimension_numbers<[1], [0], [0], [1], [0, 0, 1, 1], [], []>} : vector<5x32xf32>, vector<32x256xf32>, vector<5x256xf32> -> vector<5x256xf32>
    %c0_21 = arith.constant 0 : index
    %c0_22 = arith.constant 0 : index
    %68 = vector.load %arg5[%c0_21, %c0_22] : memref<5x1xf32, #tpu.memory_space<vmem>>, vector<5x1xf32>
    %69 = vector.broadcast %68 : vector<5x1xf32> to vector<5x256xf32>
    %70 = arith.addf %67, %69 : vector<5x256xf32>
    %c0_23 = arith.constant 0 : index
    %c0_24 = arith.constant 0 : index
    %71 = vector.load %arg6[%c0_23, %c0_24] : memref<256x512xf32, #tpu.memory_space<vmem>>, vector<256x512xf32>
    %cst_25 = arith.constant dense<0.000000e+00> : vector<5x512xf32>
    %72 = tpu.matmul %70, %71, %cst_25 {dimension_numbers = #tpu.dot_dimension_numbers<[1], [0], [0], [1], [0, 0, 1, 1], [], []>} : vector<5x256xf32>, vector<256x512xf32>, vector<5x512xf32> -> vector<5x512xf32>
    %c0_26 = arith.constant 0 : index
    %c0_27 = arith.constant 0 : index
    %73 = vector.load %arg7[%c0_26, %c0_27] : memref<512x1024xf32, #tpu.memory_space<vmem>>, vector<512x1024xf32>
    %cst_28 = arith.constant dense<0.000000e+00> : vector<5x1024xf32>
    %74 = tpu.matmul %72, %73, %cst_28 {dimension_numbers = #tpu.dot_dimension_numbers<[1], [0], [0], [1], [0, 0, 1, 1], [], []>} : vector<5x512xf32>, vector<512x1024xf32>, vector<5x1024xf32> -> vector<5x1024xf32>
    %c0_29 = arith.constant 0 : index
    %c0_30 = arith.constant 0 : index
    %c0_31 = arith.constant 0 : index
    %75 = vector.load %arg8[%c0_29, %c0_30, %c0_31] : memref<1x5x1024xf32, #tpu.memory_space<vmem>>, vector<1x5x1024xf32>
    %76 = vector.shape_cast %75 : vector<1x5x1024xf32> to vector<5x1024xf32>
    %77 = vector.shape_cast %74 : vector<5x1024xf32> to vector<1x5x1024xf32>
    tpu.vector_store %arg8[%c0_29, %c0_30, %c0_31], %77 {strides = array<i32>} : memref<1x5x1024xf32, #tpu.memory_space<vmem>>, vector<1x5x1024xf32>,
    return
  }
  func.func @transform_0(%arg0: i32) -> (i32, i32, i32) {
    %c0_i32 = arith.constant 0 : i32
    %c0_i32_0 = arith.constant 0 : i32
    %c0_i32_1 = arith.constant 0 : i32
    return %arg0, %c0_i32, %c0_i32_0 : i32, i32, i32
  }
  func.func @transform_1(%arg0: i32) -> (i32, i32) {
    %c0_i32 = arith.constant 0 : i32
    %c0_i32_0 = arith.constant 0 : i32
    %c0_i32_1 = arith.constant 0 : i32
    return %c0_i32, %c0_i32_0 : i32, i32
  }
  func.func @transform_2(%arg0: i32) -> (i32, i32) {
    %c0_i32 = arith.constant 0 : i32
    %c0_i32_0 = arith.constant 0 : i32
    %c0_i32_1 = arith.constant 0 : i32
    return %c0_i32, %c0_i32_0 : i32, i32
  }
  func.func @transform_3(%arg0: i32) -> (i32, i32) {
    %c0_i32 = arith.constant 0 : i32
    %c0_i32_0 = arith.constant 0 : i32
    %c0_i32_1 = arith.constant 0 : i32
    return %c0_i32, %c0_i32_0 : i32, i32
  }
  func.func @transform_4(%arg0: i32) -> (i32, i32) {
    %c0_i32 = arith.constant 0 : i32
    %c0_i32_0 = arith.constant 0 : i32
    %c0_i32_1 = arith.constant 0 : i32
    return %c0_i32, %c0_i32_0 : i32, i32
  }
  func.func @transform_5(%arg0: i32) -> (i32, i32) {
    %c0_i32 = arith.constant 0 : i32
    %c0_i32_0 = arith.constant 0 : i32
    %c0_i32_1 = arith.constant 0 : i32
    return %c0_i32, %c0_i32_0 : i32, i32
  }
  func.func @transform_6(%arg0: i32) -> (i32, i32) {
    %c0_i32 = arith.constant 0 : i32
    %c0_i32_0 = arith.constant 0 : i32
    %c0_i32_1 = arith.constant 0 : i32
    return %c0_i32, %c0_i32_0 : i32, i32
  }
  func.func @transform_7(%arg0: i32) -> (i32, i32, i32) {
    %c0_i32 = arith.constant 0 : i32
    %c0_i32_0 = arith.constant 0 : i32
    %c0_i32_1 = arith.constant 0 : i32
    return %arg0, %c0_i32, %c0_i32_0 : i32, i32, i32
  }
}

</mosaic_0001>

<llo_original>
// kernel: head_forward.1
$region0: #{head_forward.1}
  #allocation0 [shape = 'u32[]', space=smem, size = 0x4, offset = 0x4, fixed_abs, tag = 'smem constant byte address 0x4 - core index']
  #allocation1 [shape = 'u32[72,128]{1,0:T(1,128)}', space=vmem, size = 0x9000, scoped, tag = 'internal scratch']
  %s0 = inlined_call_operand.vmem [shape: f32[2,4,256], index: 0, kind: input, shape index: {}]
  %s1 = inlined_call_operand.vmem [shape: f32[32,36], index: 1, kind: input, shape index: {}]
  %s2 = inlined_call_operand.vmem [shape: f32[32,1], index: 2, kind: input, shape index: {}]
  %s3 = inlined_call_operand.vmem [shape: f32[5,32], index: 3, kind: input, shape index: {}]
  %s4 = inlined_call_operand.vmem [shape: f32[5,1], index: 4, kind: input, shape index: {}]
  %s5 = inlined_call_operand.vmem [shape: f32[256,512], index: 5, kind: input, shape index: {}]
  %s6 = inlined_call_operand.vmem [shape: f32[512,1024], index: 6, kind: input, shape index: {}]
  %s7 = inlined_call_operand.vmem [shape: f32[2,5,1024], index: 7, kind: output, shape index: {}]
  %s8 = sld [smem:[#allocation0]]
  $region61: #{head_forward.1} parent=0
    _
  %s10 = ssub.s32 1, %s8
  %s11 = scalar_select 0, %s10, %s8
  loop: start=0, step=1, limit=4
  $region2: #{head_forward.1} parent=0 // loop_pre_header
    _
  $region3: #{head_forward.1} parent=0 // loop_header
    %s13 = sphi 0, %s17
    %p14 = scmp.ge.s32.totalorder %s13, 4
    %s23 = sphi 0, %s25
    %s26 = sphi 0, %s23
    %s27 = sphi 0, %s26
    %s43 = sphi 0, %s27
    %s47 = sphi 0, %s47
    %s49 = sphi 0, %s47
    %s50 = sphi 0, %s49
    %s64 = sphi 0, %s50
    %s68 = sphi 0, %s68
    %s70 = sphi 0, %s68
    %s71 = sphi 0, %s70
    %s85 = sphi 0, %s71
    %s89 = sphi 0, %s89
    %s91 = sphi 0, %s89
    %s92 = sphi 0, %s91
    %s106 = sphi 0, %s92
    %s110 = sphi 0, %s110
    %s112 = sphi 0, %s110
    %s113 = sphi 0, %s112
    %s127 = sphi 0, %s113
    %s131 = sphi 0, %s131
    %s133 = sphi 0, %s131
    %s134 = sphi 0, %s133
    %s148 = sphi 0, %s134
    %s152 = sphi 0, %s152
    %s154 = sphi 0, %s152
    %s155 = sphi 0, %s154
    %s169 = sphi 0, %s155
    %s175 = sphi 0, %s177
    %s178 = sphi 0, %s175
    %s179 = sphi 0, %s178
    %s195 = sphi 0, %s179
  $region4: #{head_forward.1} parent=0 // loop_header_branch
    %16 = sbr.rel (%p14) target = $region8
  $region5: #{head_forward.1} parent=0 // loop_body
    %s18 = ssub.s32 %s13, 1
    %s19 = ssub.s32 %s13, 2
    %s20 = sadd.s32 %s13, 1
    %s21 = ssub.s32 %s13, %s20
    %p22 = scmp.eq.s32.totalorder %s21, 0
    %s24 = sadd.s32 %s23, 1
    %s25 = scalar_select %p22, %s23, %s24
    %p28 = pneg %p22
    %p29 = scmp.eq.s32.totalorder %s13, 1
    %p30 = por %p28, %p29
    %p31 = scmp.ne.s32.totalorder %s23, %s26
    %p32 = scmp.eq.s32.totalorder %s13, 0
    %p33 = por %p31, %p32
    %p34 = scmp.ne.s32.totalorder %s23, %s26
    %p35 = scmp.eq.s32.totalorder %s18, 1
    %p36 = por %p34, %p35
    %p37 = scmp.ne.s32.totalorder %s26, %s27
    %p38 = scmp.eq.s32.totalorder %s18, 0
    %p39 = por %p37, %p38
    %p40 = scmp.ne.s32.totalorder %s26, %s27
    %p41 = scmp.eq.s32.totalorder %s19, 1
    %p42 = por %p40, %p41
    %p44 = scmp.ne.s32.totalorder %s27, %s43
    %p45 = scmp.eq.s32.totalorder %s19, 0
    %p46 = por %p44, %p45
    %s48 = sadd.s32 %s47, 1
    %p51 = scmp.eq.s32.totalorder %s13, 1
    %p52 = scmp.ne.s32.totalorder %s47, %s49
    %p53 = scmp.eq.s32.totalorder %s13, 0
    %p54 = por %p52, %p53
    %p55 = scmp.ne.s32.totalorder %s47, %s49
    %p56 = scmp.eq.s32.totalorder %s18, 1
    %p57 = por %p55, %p56
    %p58 = scmp.ne.s32.totalorder %s49, %s50
    %p59 = scmp.eq.s32.totalorder %s18, 0
    %p60 = por %p58, %p59
    %p61 = scmp.ne.s32.totalorder %s49, %s50
    %p62 = scmp.eq.s32.totalorder %s19, 1
    %p63 = por %p61, %p62
    %p65 = scmp.ne.s32.totalorder %s50, %s64
    %p66 = scmp.eq.s32.totalorder %s19, 0
    %p67 = por %p65, %p66
    %s69 = sadd.s32 %s68, 1
    %p72 = scmp.eq.s32.totalorder %s13, 1
    %p73 = scmp.ne.s32.totalorder %s68, %s70
    %p74 = scmp.eq.s32.totalorder %s13, 0
    %p75 = por %p73, %p74
    %p76 = scmp.ne.s32.totalorder %s68, %s70
    %p77 = scmp.eq.s32.totalorder %s18, 1
    %p78 = por %p76, %p77
    %p79 = scmp.ne.s32.totalorder %s70, %s71
    %p80 = scmp.eq.s32.totalorder %s18, 0
    %p81 = por %p79, %p80
    %p82 = scmp.ne.s32.totalorder %s70, %s71
    %p83 = scmp.eq.s32.totalorder %s19, 1
    %p84 = por %p82, %p83
    %p86 = scmp.ne.s32.totalorder %s71, %s85
    %p87 = scmp.eq.s32.totalorder %s19, 0
    %p88 = por %p86, %p87
    %s90 = sadd.s32 %s89, 1
    %p93 = scmp.eq.s32.totalorder %s13, 1
    %p94 = scmp.ne.s32.totalorder %s89, %s91
    %p95 = scmp.eq.s32.totalorder %s13, 0
    %p96 = por %p94, %p95
    %p97 = scmp.ne.s32.totalorder %s89, %s91
    %p98 = scmp.eq.s32.totalorder %s18, 1
    %p99 = por %p97, %p98
    %p100 = scmp.ne.s32.totalorder %s91, %s92
    %p101 = scmp.eq.s32.totalorder %s18, 0
    %p102 = por %p100, %p101
    %p103 = scmp.ne.s32.totalorder %s91, %s92
    %p104 = scmp.eq.s32.totalorder %s19, 1
    %p105 = por %p103, %p104
    %p107 = scmp.ne.s32.totalorder %s92, %s106
    %p108 = scmp.eq.s32.totalorder %s19, 0
    %p109 = por %p107, %p108
    %s111 = sadd.s32 %s110, 1
    %p114 = scmp.eq.s32.totalorder %s13, 1
    %p115 = scmp.ne.s32.totalorder %s110, %s112
    %p116 = scmp.eq.s32.totalorder %s13, 0
    %p117 = por %p115, %p116
    %p118 = scmp.ne.s32.totalorder %s110, %s112
    %p119 = scmp.eq.s32.totalorder %s18, 1
    %p120 = por %p118, %p119
    %p121 = scmp.ne.s32.totalorder %s112, %s113
    %p122 = scmp.eq.s32.totalorder %s18, 0
    %p123 = por %p121, %p122
    %p124 = scmp.ne.s32.totalorder %s112, %s113
    %p125 = scmp.eq.s32.totalorder %s19, 1
    %p126 = por %p124, %p125
    %p128 = scmp.ne.s32.totalorder %s113, %s127
    %p129 = scmp.eq.s32.totalorder %s19, 0
    %p130 = por %p128, %p129
    %s132 = sadd.s32 %s131, 1
    %p135 = scmp.eq.s32.totalorder %s13, 1
    %p136 = scmp.ne.s32.totalorder %s131, %s133
    %p137 = scmp.eq.s32.totalorder %s13, 0
    %p138 = por %p136, %p137
    %p139 = scmp.ne.s32.totalorder %s131, %s133
    %p140 = scmp.eq.s32.totalorder %s18, 1
    %p141 = por %p139, %p140
    %p142 = scmp.ne.s32.totalorder %s133, %s134
    %p143 = scmp.eq.s32.totalorder %s18, 0
    %p144 = por %p142, %p143
    %p145 = scmp.ne.s32.totalorder %s133, %s134
    %p146 = scmp.eq.s32.totalorder %s19, 1
    %p147 = por %p145, %p146
    %p149 = scmp.ne.s32.totalorder %s134, %s148
    %p150 = scmp.eq.s32.totalorder %s19, 0
    %p151 = por %p149, %p150
    %s153 = sadd.s32 %s152, 1
    %p156 = scmp.eq.s32.totalorder %s13, 1
    %p157 = scmp.ne.s32.totalorder %s152, %s154
    %p158 = scmp.eq.s32.totalorder %s13, 0
    %p159 = por %p157, %p158
    %p160 = scmp.ne.s32.totalorder %s152, %s154
    %p161 = scmp.eq.s32.totalorder %s18, 1
    %p162 = por %p160, %p161
    %p163 = scmp.ne.s32.totalorder %s154, %s155
    %p164 = scmp.eq.s32.totalorder %s18, 0
    %p165 = por %p163, %p164
    %p166 = scmp.ne.s32.totalorder %s154, %s155
    %p167 = scmp.eq.s32.totalorder %s19, 1
    %p168 = por %p166, %p167
    %p170 = scmp.ne.s32.totalorder %s155, %s169
    %p171 = scmp.eq.s32.totalorder %s19, 0
    %p172 = por %p170, %p171
    %s173 = ssub.s32 %s13, %s20
    %p174 = scmp.eq.s32.totalorder %s173, 0
    %s176 = sadd.s32 %s175, 1
    %s177 = scalar_select %p174, %s175, %s176
    %p180 = pneg %p174
    %p181 = scmp.eq.s32.totalorder %s13, 1
    %p182 = por %p180, %p181
    %p183 = scmp.ne.s32.totalorder %s175, %s178
    %p184 = scmp.eq.s32.totalorder %s13, 0
    %p185 = por %p183, %p184
    %p186 = scmp.ne.s32.totalorder %s175, %s178
    %p187 = scmp.eq.s32.totalorder %s18, 1
    %p188 = por %p186, %p187
    %p189 = scmp.ne.s32.totalorder %s178, %s179
    %p190 = scmp.eq.s32.totalorder %s18, 0
    %p191 = por %p189, %p190
    %p192 = scmp.ne.s32.totalorder %s178, %s179
    %p193 = scmp.eq.s32.totalorder %s19, 1
    %p194 = por %p192, %p193
    %p196 = scmp.ne.s32.totalorder %s179, %s195
    %p197 = scmp.eq.s32.totalorder %s19, 0
    %p198 = por %p196, %p197
    %p199 = scmp.le.s32.totalorder 1, %s13
    %p200 = scmp.lt.s32.totalorder %s13, 3
    %p201 = pnand %p199, %p200
    %p202 = pneg %p201
    // Predicated region
    $region9: #{head_forward.1} parent=5 // pred_check
      _
    $region10: #{head_forward.1} parent=5 // pred_check_branch
      %204 = sbr.rel (%p201) target = $region12
    $region11: #{head_forward.1} parent=5 // pred_region
      %s205 = ssub.s32 %s13, 1
      // Predicated region
      $region13: #{head_forward.1} parent=11 // pred_check
        %p206 = pneg %p60
      $region14: #{head_forward.1} parent=11 // pred_check_branch
        %208 = sbr.rel (%p206) target = $region16
      $region15: #{head_forward.1} parent=11 // pred_region
        _
      $region16: #{head_forward.1} parent=11 // pred_fallthru
        _
      // Predicated region
      $region17: #{head_forward.1} parent=11 // pred_check
        %p209 = pneg %p81
      $region18: #{head_forward.1} parent=11 // pred_check_branch
        %211 = sbr.rel (%p209) target = $region20
      $region19: #{head_forward.1} parent=11 // pred_region
        _
      $region20: #{head_forward.1} parent=11 // pred_fallthru
        _
      // Predicated region
      $region21: #{head_forward.1} parent=11 // pred_check
        %p212 = pneg %p102
      $region22: #{head_forward.1} parent=11 // pred_check_branch
        %214 = sbr.rel (%p212) target = $region24
      $region23: #{head_forward.1} parent=11 // pred_region
        _
      $region24: #{head_forward.1} parent=11 // pred_fallthru
        _
      // Predicated region
      $region25: #{head_forward.1} parent=11 // pred_check
        %p215 = pneg %p123
      $region26: #{head_forward.1} parent=11 // pred_check_branch
        %217 = sbr.rel (%p215) target = $region28
      $region27: #{head_forward.1} parent=11 // pred_region
        _
      $region28: #{head_forward.1} parent=11 // pred_fallthru
        _
      // Predicated region
      $region29: #{head_forward.1} parent=11 // pred_check
        %p218 = pneg %p144
      $region30: #{head_forward.1} parent=11 // pred_check_branch
        %220 = sbr.rel (%p218) target = $region32
      $region31: #{head_forward.1} parent=11 // pred_region
        _
      $region32: #{head_forward.1} parent=11 // pred_fallthru
        _
      // Predicated region
      $region33: #{head_forward.1} parent=11 // pred_check
        %p221 = pneg %p165
      $region34: #{head_forward.1} parent=11 // pred_check_branch
        %223 = sbr.rel (%p221) target = $region36
      $region35: #{head_forward.1} parent=11 // pred_region
        _
      $region36: #{head_forward.1} parent=11 // pred_fallthru
        _
    $region12: #{head_forward.1} parent=5 // pred_fallthru
      _
    %p224 = scmp.lt.s32.totalorder %s13, 2
    // Predicated region
    $region37: #{head_forward.1} parent=5 // pred_check
      %p225 = pneg %p224
    $region38: #{head_forward.1} parent=5 // pred_check_branch
      %227 = sbr.rel (%p225) target = $region40
    $region39: #{head_forward.1} parent=5 // pred_region
      // Predicated region
      $region41: #{head_forward.1} parent=39 // pred_check
        %p228 = pneg %p33
      $region42: #{head_forward.1} parent=39 // pred_check_branch
        %230 = sbr.rel (%p228) target = $region44
      $region43: #{head_forward.1} parent=39 // pred_region
        %p231 = scmp.lt.s32.totalorder %s13, 1
        %s232 = scalar_select %p231, %s13, 1
        %s233 = smul.addr %s232, 2
        %s234 = smul.addr %s233, 4
        %s235 = scalar_lea.vmem %s0, %s234
      $region44: #{head_forward.1} parent=39 // pred_fallthru
        _
    $region40: #{head_forward.1} parent=5 // pred_fallthru
      _
    %p236 = scmp.le.s32.totalorder 1, %s13
    %p237 = scmp.lt.s32.totalorder %s13, 3
    %p238 = pnand %p236, %p237
    %p239 = pneg %p238
    // Predicated region
    $region45: #{head_forward.1} parent=5 // pred_check
      _
    $region46: #{head_forward.1} parent=5 // pred_check_branch
      %241 = sbr.rel (%p238) target = $region48
    $region47: #{head_forward.1} parent=5 // pred_region
      %s242 = ssub.s32 %s13, 1
      %p243 = scmp.lt.s32.totalorder %s18, 1
      %s244 = scalar_select %p243, %s18, 1
      %s245 = smul.addr %s244, 2
      %s246 = smul.addr %s245, 4
      %s247 = scalar_lea.vmem %s0, %s246
      %p248 = pneg %p39
      %p249 = pneg %p36
      %p250 = pneg %p60
      %p251 = pneg %p57
      %p252 = pneg %p81
      %p253 = pneg %p78
      %p254 = pneg %p102
      %p255 = pneg %p99
      %p256 = pneg %p123
      %p257 = pneg %p120
      %p258 = pneg %p144
      %p259 = pneg %p141
      %p260 = pneg %p165
      %p261 = pneg %p162
      %p262 = pneg %p191
      %p263 = pneg %p188
      %p264 = scmp.lt.s32.totalorder %s18, 1
      %s265 = scalar_select %p264, %s18, 1
      %s266 = smul.addr %s265, 8
      %s267 = smul.addr %s266, 8
      %s268 = scalar_lea.vmem %s7, %s267
      %p269 = scmp.lt.s32.totalorder %s18, 1
      %s270 = scalar_select %p269, %s18, 1
      %s271 = smul.addr %s270, 2
      %s272 = smul.addr %s271, 4
      %s273 = scalar_lea.vmem %s0, %s272
      %p274 = scmp.lt.s32.totalorder %s18, 1
      %s275 = scalar_select %p274, %s18, 1
      %s276 = smul.addr %s275, 8
      %s277 = smul.addr %s276, 8
      %s278 = scalar_lea.vmem %s7, %s277
      %v279 = vld [vmem:[%s273] sm:$0xff]
      %v280 = vlaneseq
      %v281 = vand.u32 %v280, 127
      %v282 = vadd.s32 %v281, 128
      %vm283 = vcmp.lt.s32.totalorder %v281, 0
      %v284 = vsub.s32 0, %v281
      %v285 = vsel %vm283, %v284, %v281
      %v286 = vshrl.u32 %v285, 4
      %v287 = vand.u32 %v285, 15
      %v288 = vsub.s32 0, %v287
      %v289 = vsel %vm283, %v288, %v287
      %vm290 = vcmp.lt.s32.totalorder %v282, 0
      %v291 = vsub.s32 0, %v282
      %v292 = vsel %vm290, %v291, %v282
      %v293 = vshrl.u32 %v292, 4
      %v294 = vand.u32 %v292, 15
      %v295 = vsub.s32 0, %v294
      %v296 = vsel %vm290, %v295, %v294
      %vm297 = vcmp.ne.s32.totalorder %v289, 0
      %vm298 = vcmp.ne.s32.totalorder %v296, 0
      %vm299 = vcmp.lt.s32.totalorder %v289, 0
      %vm300 = vcmp.lt.s32.totalorder %v296, 0
      %vm301 = vmand %vm299, %vm297
      %vm302 = vmand %vm300, %vm298
      %v303 = vadd.s32 %v289, 16
      %v304 = vadd.s32 %v296, 16
      %v305 = vsel %vm301, %v303, %v289
      %v306 = vsel %vm302, %v304, %v296
      %vm307 = vcmp.eq.s32.totalorder %v305, 0
      %vm308 = vcmp.eq.s32.totalorder %v306, 0
      %vm309 = vcmp.eq.s32.totalorder %v305, 15
      %vm310 = vcmp.eq.s32.totalorder %v306, 15
      %312 = vst [vmem:[#allocation1] ss:$2 sm:$0xff] %v279
      %v313 = vld.sshfl [vmem:[#allocation1] sm:$0xff pattern:$0x75316420]
      %v314 = vld.sshfl [vmem:[#allocation1 + $0x8] sm:$0xff pattern:$0x75316420]
      %315 = vrot.lane.b32.xlu0 %v313, 17
      %v316 = vpop.permute.xlu0 %315
      %317 = vrot.lane.b32.xlu0 %v314, 17
      %v318 = vpop.permute.xlu0 %317
      %vm319 = vcmask 138240
      %v320 = vsel %vm319, %v316, %v318
      %v324 = vsel %vm319, 0.0, %v316
      %v325 = vsel %vm319, %v318, 0.0
      %v326 = vsel %vm307, 1, 0
      %v327 = vsel %vm308, 1, 0
      %vm328 = vcmp.eq.s32.totalorder %v326, 1
      %vm329 = vcmp.eq.s32.totalorder %v327, 1
      %v330 = vsel %vm328, 0.0, %v324
      %v331 = vsel %vm329, 0.0, %v320
      %v332 = vsel %vm309, 1, 0
      %v333 = vsel %vm310, 1, 0
      %vm334 = vcmp.eq.s32.totalorder %v332, 1
      %vm335 = vcmp.eq.s32.totalorder %v333, 1
      %338 = vrot.lane.b32.xlu0 %v324, 126
      %v339 = vpop.permute.xlu0 %338
      %340 = vrot.lane.b32.xlu0 %v320, 126
      %v341 = vpop.permute.xlu0 %340
      %342 = vrot.lane.b32.xlu0 %v325, 126
      %v343 = vpop.permute.xlu0 %342
      %vm344 = vcmask 1031168
      %v345 = vsel %vm344, %v339, %v341
      %v346 = vsel %vm344, %v341, %v343
      %v349 = vsel %vm334, 0.0, %v345
      %v350 = vsel %vm335, 0.0, %v346
      %351 = vrot.lane.b32.xlu0 %v324, 112
      %v352 = vpop.permute.xlu0 %351
      %353 = vrot.lane.b32.xlu0 %v320, 112
      %v354 = vpop.permute.xlu0 %353
      %355 = vrot.lane.b32.xlu0 %v325, 112
      %v356 = vpop.permute.xlu0 %355
      %vm357 = vcmask 916480
      %v358 = vsel %vm357, %v352, %v354
      %v359 = vsel %vm357, %v354, %v356
      %v362 = vsel %vm328, 0.0, %v358
      %v363 = vsel %vm329, 0.0, %v359
      %364 = vrot.lane.b32.xlu0 %v324, 110
      %v365 = vpop.permute.xlu0 %364
      %366 = vrot.lane.b32.xlu0 %v320, 110
      %v367 = vpop.permute.xlu0 %366
      %368 = vrot.lane.b32.xlu0 %v325, 110
      %v369 = vpop.permute.xlu0 %368
      %vm370 = vcmask 900096
      %v371 = vsel %vm370, %v365, %v367
      %v372 = vsel %vm370, %v367, %v369
      %v375 = vsel %vm334, 0.0, %v371
      %v376 = vsel %vm335, 0.0, %v372
      %377 = vrot.lane.b32.xlu0 %v324, 96
      %v378 = vpop.permute.xlu0 %377
      %379 = vrot.lane.b32.xlu0 %v320, 96
      %v380 = vpop.permute.xlu0 %379
      %381 = vrot.lane.b32.xlu0 %v325, 96
      %v382 = vpop.permute.xlu0 %381
      %vm383 = vcmask 785408
      %v384 = vsel %vm383, %v378, %v380
      %v385 = vsel %vm383, %v380, %v382
      %v388 = vsel %vm328, 0.0, %v384
      %v389 = vsel %vm329, 0.0, %v385
      %390 = vrot.lane.b32.xlu0 %v324, 94
      %v391 = vpop.permute.xlu0 %390
      %392 = vrot.lane.b32.xlu0 %v320, 94
      %v393 = vpop.permute.xlu0 %392
      %394 = vrot.lane.b32.xlu0 %v325, 94
      %v395 = vpop.permute.xlu0 %394
      %vm396 = vcmask 769024
      %v397 = vsel %vm396, %v391, %v393
      %v398 = vsel %vm396, %v393, %v395
      %v401 = vsel %vm334, 0.0, %v397
      %v402 = vsel %vm335, 0.0, %v398
      %v403 = vrot.slane %v324, 4
      %v404 = vrot.slane %v320, 4
      %v405 = vrot.slane %v325, 4
      %406 = vrot.lane.b32.xlu0 %v403, 127
      %v407 = vpop.permute.xlu0 %406
      %408 = vrot.lane.b32.xlu0 %v404, 127
      %v409 = vpop.permute.xlu0 %408
      %410 = vrot.lane.b32.xlu0 %v405, 127
      %v411 = vpop.permute.xlu0 %410
      %vm412 = vcmask 1039360
      %v413 = vsel %vm412, %v407, %v409
      %v414 = vsel %vm412, %v409, %v411
      %v419 = vrot.slane %v362, 4
      %v420 = vrot.slane %v363, 4
      %423 = vrot.lane.b32.xlu0 %v324, 111
      %v424 = vpop.permute.xlu0 %423
      %425 = vrot.lane.b32.xlu0 %v320, 111
      %v426 = vpop.permute.xlu0 %425
      %427 = vrot.lane.b32.xlu0 %v325, 111
      %v428 = vpop.permute.xlu0 %427
      %vm429 = vcmask 908288
      %v430 = vsel %vm429, %v424, %v426
      %v431 = vsel %vm429, %v426, %v428
      %v436 = vrot.slane %v375, 4
      %v437 = vrot.slane %v376, 4
      %440 = vrot.lane.b32.xlu0 %v403, 95
      %v441 = vpop.permute.xlu0 %440
      %442 = vrot.lane.b32.xlu0 %v404, 95
      %v443 = vpop.permute.xlu0 %442
      %444 = vrot.lane.b32.xlu0 %v405, 95
      %v445 = vpop.permute.xlu0 %444
      %vm446 = vcmask 777216
      %v447 = vsel %vm446, %v441, %v443
      %v448 = vsel %vm446, %v443, %v445
      %vm451 = vcmask 1043456
      %v452 = vsel %vm451, %v330, %v413
      %v453 = vsel %vm451, %v331, %v414
      %v454 = vsel %vm451, %v349, %v419
      %v455 = vsel %vm451, %v350, %v420
      %v456 = vsel %vm451, %v430, %v436
      %v457 = vsel %vm451, %v431, %v437
      %v458 = vsel %vm451, %v388, %v447
      %v459 = vsel %vm451, %v389, %v448
      %v460 = vld [vmem:[%s1] sm:$0xff]
      %v461 = vld [vmem:[%s1 + $0x8] sm:$0xff]
      %v462 = vld [vmem:[%s1 + $0x10] sm:$0xff]
      %v463 = vld [vmem:[%s1 + $0x18] sm:$0xff]
      %v464 = vld [vmem:[%s2] sm:$0xff]
      %v465 = vld [vmem:[%s2 + $0x8] sm:$0xff]
      %v466 = vld [vmem:[%s2 + $0x10] sm:$0xff]
      %v467 = vld [vmem:[%s2 + $0x18] sm:$0xff]
      %469 = vset.pattern.permute.xlu0 0
      %470 = vperm.xlu0 %469, %v464
      %v471 = vpop.permute.xlu0 %470
      %474 = vset.pattern.permute.xlu0 0
      %475 = vperm.xlu0 %474, %v465
      %v476 = vpop.permute.xlu0 %475
      %479 = vset.pattern.permute.xlu0 0
      %480 = vperm.xlu0 %479, %v466
      %v481 = vpop.permute.xlu0 %480
      %484 = vset.pattern.permute.xlu0 0
      %485 = vperm.xlu0 %484, %v467
      %v486 = vpop.permute.xlu0 %485
      %vm488 = vcmask 293888
      %v490 = vsel %vm488, %v460, 0
      %v493 = vsel %vm488, %v461, 0
      %v496 = vsel %vm488, %v462, 0
      %v499 = vsel %vm488, %v463, 0
      %v502 = vsel %vm451, %v401, 0
      %v505 = vsel %vm451, %v402, 0
      %507 = vmatpush.msra.mxu0 0.0
      %508 = vmatpush.msra.mxu0 0.0
      %509 = vmatpush.msra.mxu0 0.0
      %510 = vmatpush.msra.mxu0 0.0
      %511 = vmatpush.msra.mxu0 0.0
      %512 = vmatpush.msra.mxu0 0.0
      %513 = vmatpush.msra.mxu0 0.0
      %514 = vmatpush.msra.mxu0 0.0
      %515 = vmatpush.msra.mxu0 0.0
      %516 = vmatpush.msra.mxu0 0.0
      %517 = vmatpush.msra.mxu0 0.0
      %518 = vmatpush.msra.mxu0 %v502
      %519 = vmatpush.msra.mxu0 %v458
      %520 = vmatpush.msra.mxu0 %v456
      %521 = vmatpush.msra.mxu0 %v454
      %522 = vmatpush.msra.mxu0 %v452
      %523 = vmatmul.f32.gmra.mxu0 %v490
      %v524 = vpop.f32.mrf.mxu0
      %v525 = vadd.f32 %v471, %v524
      %526 = vmatmul.f32.gmra.mxu0 %v493
      %v527 = vpop.f32.mrf.mxu0
      %v528 = vadd.f32 %v476, %v527
      %529 = vmatmul.f32.gmra.mxu0 %v496
      %v530 = vpop.f32.mrf.mxu0
      %v531 = vadd.f32 %v481, %v530
      %532 = vmatmul.f32.gmra.mxu0 %v499
      %v533 = vpop.f32.mrf.mxu0
      %v534 = vadd.f32 %v486, %v533
      %535 = vdwg.mxu0
      %536 = vmatpush.msra.mxu0 0.0
      %537 = vmatpush.msra.mxu0 0.0
      %538 = vmatpush.msra.mxu0 0.0
      %539 = vmatpush.msra.mxu0 0.0
      %540 = vmatpush.msra.mxu0 0.0
      %541 = vmatpush.msra.mxu0 0.0
      %542 = vmatpush.msra.mxu0 0.0
      %543 = vmatpush.msra.mxu0 0.0
      %544 = vmatpush.msra.mxu0 0.0
      %545 = vmatpush.msra.mxu0 0.0
      %546 = vmatpush.msra.mxu0 0.0
      %547 = vmatpush.msra.mxu0 %v505
      %548 = vmatpush.msra.mxu0 %v459
      %549 = vmatpush.msra.mxu0 %v457
      %550 = vmatpush.msra.mxu0 %v455
      %551 = vmatpush.msra.mxu0 %v453
      %552 = vmatmul.f32.gmra.mxu0 %v490
      %v553 = vpop.f32.mrf.mxu0
      %v554 = vadd.f32 %v471, %v553
      %555 = vmatmul.f32.gmra.mxu0 %v493
      %v556 = vpop.f32.mrf.mxu0
      %v557 = vadd.f32 %v476, %v556
      %558 = vmatmul.f32.gmra.mxu0 %v496
      %v559 = vpop.f32.mrf.mxu0
      %v560 = vadd.f32 %v481, %v559
      %561 = vmatmul.f32.gmra.mxu0 %v499
      %v562 = vpop.f32.mrf.mxu0
      %v563 = vadd.f32 %v486, %v562
      %564 = vdwg.mxu0
      %v565 = vmax.f32 %v525, 0.0
      %v566 = vmax.f32 %v554, 0.0
      %v567 = vmax.f32 %v528, 0.0
      %v568 = vmax.f32 %v557, 0.0
      %v569 = vmax.f32 %v531, 0.0
      %v570 = vmax.f32 %v560, 0.0
      %v571 = vmax.f32 %v534, 0.0
      %v572 = vmax.f32 %v563, 0.0
      %v573 = vld [vmem:[%s3] sm:$0x1f]
      %v574 = vld [vmem:[%s4] sm:$0x1f]
      %576 = vset.pattern.permute.xlu0 0
      %577 = vperm.xlu0 %576, %v574
      %v578 = vpop.permute.xlu0 %577
      %vm580 = vcmask 261120
      %v582 = vsel %vm580, %v573, 0
      %584 = vmatpush.msra.mxu0 0.0
      %585 = vmatpush.msra.mxu0 0.0
      %586 = vmatpush.msra.mxu0 0.0
      %587 = vmatpush.msra.mxu0 0.0
      %588 = vmatpush.msra.mxu0 0.0
      %589 = vmatpush.msra.mxu0 0.0
      %590 = vmatpush.msra.mxu0 0.0
      %591 = vmatpush.msra.mxu0 0.0
      %592 = vmatpush.msra.mxu0 0.0
      %593 = vmatpush.msra.mxu0 0.0
      %594 = vmatpush.msra.mxu0 0.0
      %595 = vmatpush.msra.mxu0 0.0
      %596 = vmatpush.msra.mxu0 %v571
      %597 = vmatpush.msra.mxu0 %v569
      %598 = vmatpush.msra.mxu0 %v567
      %599 = vmatpush.msra.mxu0 %v565
      %600 = vmatmul.f32.gmra.mxu0 %v582
      %v601 = vpop.f32.mrf.mxu0
      %v602 = vadd.f32 %v578, %v601
      %603 = vdwg.mxu0
      %604 = vmatpush.msra.mxu0 0.0
      %605 = vmatpush.msra.mxu0 0.0
      %606 = vmatpush.msra.mxu0 0.0
      %607 = vmatpush.msra.mxu0 0.0
      %608 = vmatpush.msra.mxu0 0.0
      %609 = vmatpush.msra.mxu0 0.0
      %610 = vmatpush.msra.mxu0 0.0
      %611 = vmatpush.msra.mxu0 0.0
      %612 = vmatpush.msra.mxu0 0.0
      %613 = vmatpush.msra.mxu0 0.0
      %614 = vmatpush.msra.mxu0 0.0
      %615 = vmatpush.msra.mxu0 0.0
      %616 = vmatpush.msra.mxu0 %v572
      %617 = vmatpush.msra.mxu0 %v570
      %618 = vmatpush.msra.mxu0 %v568
      %619 = vmatpush.msra.mxu0 %v566
      %620 = vmatmul.f32.gmra.mxu0 %v582
      %v621 = vpop.f32.mrf.mxu0
      %v622 = vadd.f32 %v578, %v621
      %623 = vdwg.mxu0
      %v624 = vld [vmem:[%s5] sm:$0xff]
      %v625 = vld [vmem:[%s5 + $0x8] sm:$0xff]
      %v626 = vld [vmem:[%s5 + $0x10] sm:$0xff]
      %v627 = vld [vmem:[%s5 + $0x18] sm:$0xff]
      %v628 = vld [vmem:[%s5 + $0x20] sm:$0xff]
      %v629 = vld [vmem:[%s5 + $0x28] sm:$0xff]
      %v630 = vld [vmem:[%s5 + $0x30] sm:$0xff]
      %v631 = vld [vmem:[%s5 + $0x38] sm:$0xff]
      %v632 = vld [vmem:[%s5 + $0x40] sm:$0xff]
      %v633 = vld [vmem:[%s5 + $0x48] sm:$0xff]
      %v634 = vld [vmem:[%s5 + $0x50] sm:$0xff]
      %v635 = vld [vmem:[%s5 + $0x58] sm:$0xff]
      %v636 = vld [vmem:[%s5 + $0x60] sm:$0xff]
      %v637 = vld [vmem:[%s5 + $0x68] sm:$0xff]
      %v638 = vld [vmem:[%s5 + $0x70] sm:$0xff]
      %v639 = vld [vmem:[%s5 + $0x78] sm:$0xff]
      %v640 = vld [vmem:[%s5 + $0x80] sm:$0xff]
      %v641 = vld [vmem:[%s5 + $0x88] sm:$0xff]
      %v642 = vld [vmem:[%s5 + $0x90] sm:$0xff]
      %v643 = vld [vmem:[%s5 + $0x98] sm:$0xff]
      %v644 = vld [vmem:[%s5 + $0xa0] sm:$0xff]
      %v645 = vld [vmem:[%s5 + $0xa8] sm:$0xff]
      %v646 = vld [vmem:[%s5 + $0xb0] sm:$0xff]
      %v647 = vld [vmem:[%s5 + $0xb8] sm:$0xff]
      %v648 = vld [vmem:[%s5 + $0xc0] sm:$0xff]
      %v649 = vld [vmem:[%s5 + $0xc8] sm:$0xff]
      %v650 = vld [vmem:[%s5 + $0xd0] sm:$0xff]
      %v651 = vld [vmem:[%s5 + $0xd8] sm:$0xff]
      %v652 = vld [vmem:[%s5 + $0xe0] sm:$0xff]
      %v653 = vld [vmem:[%s5 + $0xe8] sm:$0xff]
      %v654 = vld [vmem:[%s5 + $0xf0] sm:$0xff]
      %v655 = vld [vmem:[%s5 + $0xf8] sm:$0xff]
      %v656 = vld [vmem:[%s5 + $0x100] sm:$0xff]
      %v657 = vld [vmem:[%s5 + $0x108] sm:$0xff]
      %v658 = vld [vmem:[%s5 + $0x110] sm:$0xff]
      %v659 = vld [vmem:[%s5 + $0x118] sm:$0xff]
      %v660 = vld [vmem:[%s5 + $0x120] sm:$0xff]
      %v661 = vld [vmem:[%s5 + $0x128] sm:$0xff]
      %v662 = vld [vmem:[%s5 + $0x130] sm:$0xff]
      %v663 = vld [vmem:[%s5 + $0x138] sm:$0xff]
      %v664 = vld [vmem:[%s5 + $0x140] sm:$0xff]
      %v665 = vld [vmem:[%s5 + $0x148] sm:$0xff]
      %v666 = vld [vmem:[%s5 + $0x150] sm:$0xff]
      %v667 = vld [vmem:[%s5 + $0x158] sm:$0xff]
      %v668 = vld [vmem:[%s5 + $0x160] sm:$0xff]
      %v669 = vld [vmem:[%s5 + $0x168] sm:$0xff]
      %v670 = vld [vmem:[%s5 + $0x170] sm:$0xff]
      %v671 = vld [vmem:[%s5 + $0x178] sm:$0xff]
      %v672 = vld [vmem:[%s5 + $0x180] sm:$0xff]
      %v673 = vld [vmem:[%s5 + $0x188] sm:$0xff]
      %v674 = vld [vmem:[%s5 + $0x190] sm:$0xff]
      %v675 = vld [vmem:[%s5 + $0x198] sm:$0xff]
      %v676 = vld [vmem:[%s5 + $0x1a0] sm:$0xff]
      %v677 = vld [vmem:[%s5 + $0x1a8] sm:$0xff]
      %v678 = vld [vmem:[%s5 + $0x1b0] sm:$0xff]
      %v679 = vld [vmem:[%s5 + $0x1b8] sm:$0xff]
      %v680 = vld [vmem:[%s5 + $0x1c0] sm:$0xff]
      %v681 = vld [vmem:[%s5 + $0x1c8] sm:$0xff]
      %v682 = vld [vmem:[%s5 + $0x1d0] sm:$0xff]
      %v683 = vld [vmem:[%s5 + $0x1d8] sm:$0xff]
      %v684 = vld [vmem:[%s5 + $0x1e0] sm:$0xff]
      %v685 = vld [vmem:[%s5 + $0x1e8] sm:$0xff]
      %v686 = vld [vmem:[%s5 + $0x1f0] sm:$0xff]
      %v687 = vld [vmem:[%s5 + $0x1f8] sm:$0xff]
      %v688 = vld [vmem:[%s5 + $0x200] sm:$0xff]
      %v689 = vld [vmem:[%s5 + $0x208] sm:$0xff]
      %v690 = vld [vmem:[%s5 + $0x210] sm:$0xff]
      %v691 = vld [vmem:[%s5 + $0x218] sm:$0xff]
      %v692 = vld [vmem:[%s5 + $0x220] sm:$0xff]
      %v693 = vld [vmem:[%s5 + $0x228] sm:$0xff]
      %v694 = vld [vmem:[%s5 + $0x230] sm:$0xff]
      %v695 = vld [vmem:[%s5 + $0x238] sm:$0xff]
      %v696 = vld [vmem:[%s5 + $0x240] sm:$0xff]
      %v697 = vld [vmem:[%s5 + $0x248] sm:$0xff]
      %v698 = vld [vmem:[%s5 + $0x250] sm:$0xff]
      %v699 = vld [vmem:[%s5 + $0x258] sm:$0xff]
      %v700 = vld [vmem:[%s5 + $0x260] sm:$0xff]
      %v701 = vld [vmem:[%s5 + $0x268] sm:$0xff]
      %v702 = vld [vmem:[%s5 + $0x270] sm:$0xff]
      %v703 = vld [vmem:[%s5 + $0x278] sm:$0xff]
      %v704 = vld [vmem:[%s5 + $0x280] sm:$0xff]
      %v705 = vld [vmem:[%s5 + $0x288] sm:$0xff]
      %v706 = vld [vmem:[%s5 + $0x290] sm:$0xff]
      %v707 = vld [vmem:[%s5 + $0x298] sm:$0xff]
      %v708 = vld [vmem:[%s5 + $0x2a0] sm:$0xff]
      %v709 = vld [vmem:[%s5 + $0x2a8] sm:$0xff]
      %v710 = vld [vmem:[%s5 + $0x2b0] sm:$0xff]
      %v711 = vld [vmem:[%s5 + $0x2b8] sm:$0xff]
      %v712 = vld [vmem:[%s5 + $0x2c0] sm:$0xff]
      %v713 = vld [vmem:[%s5 + $0x2c8] sm:$0xff]
      %v714 = vld [vmem:[%s5 + $0x2d0] sm:$0xff]
      %v715 = vld [vmem:[%s5 + $0x2d8] sm:$0xff]
      %v716 = vld [vmem:[%s5 + $0x2e0] sm:$0xff]
      %v717 = vld [vmem:[%s5 + $0x2e8] sm:$0xff]
      %v718 = vld [vmem:[%s5 + $0x2f0] sm:$0xff]
      %v719 = vld [vmem:[%s5 + $0x2f8] sm:$0xff]
      %v720 = vld [vmem:[%s5 + $0x300] sm:$0xff]
      %v721 = vld [vmem:[%s5 + $0x308] sm:$0xff]
      %v722 = vld [vmem:[%s5 + $0x310] sm:$0xff]
      %v723 = vld [vmem:[%s5 + $0x318] sm:$0xff]
      %v724 = vld [vmem:[%s5 + $0x320] sm:$0xff]
      %v725 = vld [vmem:[%s5 + $0x328] sm:$0xff]
      %v726 = vld [vmem:[%s5 + $0x330] sm:$0xff]
      %v727 = vld [vmem:[%s5 + $0x338] sm:$0xff]
      %v728 = vld [vmem:[%s5 + $0x340] sm:$0xff]
      %v729 = vld [vmem:[%s5 + $0x348] sm:$0xff]
      %v730 = vld [vmem:[%s5 + $0x350] sm:$0xff]
      %v731 = vld [vmem:[%s5 + $0x358] sm:$0xff]
      %v732 = vld [vmem:[%s5 + $0x360] sm:$0xff]
      %v733 = vld [vmem:[%s5 + $0x368] sm:$0xff]
      %v734 = vld [vmem:[%s5 + $0x370] sm:$0xff]
      %v735 = vld [vmem:[%s5 + $0x378] sm:$0xff]
      %v736 = vld [vmem:[%s5 + $0x380] sm:$0xff]
      %v737 = vld [vmem:[%s5 + $0x388] sm:$0xff]
      %v738 = vld [vmem:[%s5 + $0x390] sm:$0xff]
      %v739 = vld [vmem:[%s5 + $0x398] sm:$0xff]
      %v740 = vld [vmem:[%s5 + $0x3a0] sm:$0xff]
      %v741 = vld [vmem:[%s5 + $0x3a8] sm:$0xff]
      %v742 = vld [vmem:[%s5 + $0x3b0] sm:$0xff]
      %v743 = vld [vmem:[%s5 + $0x3b8] sm:$0xff]
      %v744 = vld [vmem:[%s5 + $0x3c0] sm:$0xff]
      %v745 = vld [vmem:[%s5 + $0x3c8] sm:$0xff]
      %v746 = vld [vmem:[%s5 + $0x3d0] sm:$0xff]
      %v747 = vld [vmem:[%s5 + $0x3d8] sm:$0xff]
      %v748 = vld [vmem:[%s5 + $0x3e0] sm:$0xff]
      %v749 = vld [vmem:[%s5 + $0x3e8] sm:$0xff]
      %v750 = vld [vmem:[%s5 + $0x3f0] sm:$0xff]
      %v751 = vld [vmem:[%s5 + $0x3f8] sm:$0xff]
      %752 = vmatpush.msra.mxu0 %v684
      %753 = vmatpush.msra.mxu0 %v680
      %754 = vmatpush.msra.mxu0 %v676
      %755 = vmatpush.msra.mxu0 %v672
      %756 = vmatpush.msra.mxu0 %v668
      %757 = vmatpush.msra.mxu0 %v664
      %758 = vmatpush.msra.mxu0 %v660
      %759 = vmatpush.msra.mxu0 %v656
      %760 = vmatpush.msra.mxu0 %v652
      %761 = vmatpush.msra.mxu0 %v648
      %762 = vmatpush.msra.mxu0 %v644
      %763 = vmatpush.msra.mxu0 %v640
      %764 = vmatpush.msra.mxu0 %v636
      %765 = vmatpush.msra.mxu0 %v632
      %766 = vmatpush.msra.mxu0 %v628
      %767 = vmatpush.msra.mxu0 %v624
      %768 = vmatmul.f32.gmra.mxu0 %v602
      %v769 = vpop.f32.mrf.mxu0
      %v770 = vadd.f32 0.0, %v769
      %771 = vdwg.mxu0
      %772 = vmatpush.msra.mxu0 %v748
      %773 = vmatpush.msra.mxu0 %v744
      %774 = vmatpush.msra.mxu0 %v740
      %775 = vmatpush.msra.mxu0 %v736
      %776 = vmatpush.msra.mxu0 %v732
      %777 = vmatpush.msra.mxu0 %v728
      %778 = vmatpush.msra.mxu0 %v724
      %779 = vmatpush.msra.mxu0 %v720
      %780 = vmatpush.msra.mxu0 %v716
      %781 = vmatpush.msra.mxu0 %v712
      %782 = vmatpush.msra.mxu0 %v708
      %783 = vmatpush.msra.mxu0 %v704
      %784 = vmatpush.msra.mxu0 %v700
      %785 = vmatpush.msra.mxu0 %v696
      %786 = vmatpush.msra.mxu0 %v692
      %787 = vmatpush.msra.mxu0 %v688
      %788 = vmatmul.f32.gmra.mxu0 %v622
      %v789 = vpop.f32.mrf.mxu0
      %v790 = vadd.f32 %v770, %v789
      %791 = vdwg.mxu0
      %792 = vmatpush.msra.mxu0 %v685
      %793 = vmatpush.msra.mxu0 %v681
      %794 = vmatpush.msra.mxu0 %v677
      %795 = vmatpush.msra.mxu0 %v673
      %796 = vmatpush.msra.mxu0 %v669
      %797 = vmatpush.msra.mxu0 %v665
      %798 = vmatpush.msra.mxu0 %v661
      %799 = vmatpush.msra.mxu0 %v657
      %800 = vmatpush.msra.mxu0 %v653
      %801 = vmatpush.msra.mxu0 %v649
      %802 = vmatpush.msra.mxu0 %v645
      %803 = vmatpush.msra.mxu0 %v641
      %804 = vmatpush.msra.mxu0 %v637
      %805 = vmatpush.msra.mxu0 %v633
      %806 = vmatpush.msra.mxu0 %v629
      %807 = vmatpush.msra.mxu0 %v625
      %808 = vmatmul.f32.gmra.mxu0 %v602
      %v809 = vpop.f32.mrf.mxu0
      %v810 = vadd.f32 0.0, %v809
      %811 = vdwg.mxu0
      %812 = vmatpush.msra.mxu0 %v749
      %813 = vmatpush.msra.mxu0 %v745
      %814 = vmatpush.msra.mxu0 %v741
      %815 = vmatpush.msra.mxu0 %v737
      %816 = vmatpush.msra.mxu0 %v733
      %817 = vmatpush.msra.mxu0 %v729
      %818 = vmatpush.msra.mxu0 %v725
      %819 = vmatpush.msra.mxu0 %v721
      %820 = vmatpush.msra.mxu0 %v717
      %821 = vmatpush.msra.mxu0 %v713
      %822 = vmatpush.msra.mxu0 %v709
      %823 = vmatpush.msra.mxu0 %v705
      %824 = vmatpush.msra.mxu0 %v701
      %825 = vmatpush.msra.mxu0 %v697
      %826 = vmatpush.msra.mxu0 %v693
      %827 = vmatpush.msra.mxu0 %v689
      %828 = vmatmul.f32.gmra.mxu0 %v622
      %v829 = vpop.f32.mrf.mxu0
      %v830 = vadd.f32 %v810, %v829
      %831 = vdwg.mxu0
      %832 = vmatpush.msra.mxu0 %v686
      %833 = vmatpush.msra.mxu0 %v682
      %834 = vmatpush.msra.mxu0 %v678
      %835 = vmatpush.msra.mxu0 %v674
      %836 = vmatpush.msra.mxu0 %v670
      %837 = vmatpush.msra.mxu0 %v666
      %838 = vmatpush.msra.mxu0 %v662
      %839 = vmatpush.msra.mxu0 %v658
      %840 = vmatpush.msra.mxu0 %v654
      %841 = vmatpush.msra.mxu0 %v650
      %842 = vmatpush.msra.mxu0 %v646
      %843 = vmatpush.msra.mxu0 %v642
      %844 = vmatpush.msra.mxu0 %v638
      %845 = vmatpush.msra.mxu0 %v634
      %846 = vmatpush.msra.mxu0 %v630
      %847 = vmatpush.msra.mxu0 %v626
      %848 = vmatmul.f32.gmra.mxu0 %v602
      %v849 = vpop.f32.mrf.mxu0
      %v850 = vadd.f32 0.0, %v849
      %851 = vdwg.mxu0
      %852 = vmatpush.msra.mxu0 %v750
      %853 = vmatpush.msra.mxu0 %v746
      %854 = vmatpush.msra.mxu0 %v742
      %855 = vmatpush.msra.mxu0 %v738
      %856 = vmatpush.msra.mxu0 %v734
      %857 = vmatpush.msra.mxu0 %v730
      %858 = vmatpush.msra.mxu0 %v726
      %859 = vmatpush.msra.mxu0 %v722
      %860 = vmatpush.msra.mxu0 %v718
      %861 = vmatpush.msra.mxu0 %v714
      %862 = vmatpush.msra.mxu0 %v710
      %863 = vmatpush.msra.mxu0 %v706
      %864 = vmatpush.msra.mxu0 %v702
      %865 = vmatpush.msra.mxu0 %v698
      %866 = vmatpush.msra.mxu0 %v694
      %867 = vmatpush.msra.mxu0 %v690
      %868 = vmatmul.f32.gmra.mxu0 %v622
      %v869 = vpop.f32.mrf.mxu0
      %v870 = vadd.f32 %v850, %v869
      %871 = vdwg.mxu0
      %872 = vmatpush.msra.mxu0 %v687
      %873 = vmatpush.msra.mxu0 %v683
      %874 = vmatpush.msra.mxu0 %v679
      %875 = vmatpush.msra.mxu0 %v675
      %876 = vmatpush.msra.mxu0 %v671
      %877 = vmatpush.msra.mxu0 %v667
      %878 = vmatpush.msra.mxu0 %v663
      %879 = vmatpush.msra.mxu0 %v659
      %880 = vmatpush.msra.mxu0 %v655
      %881 = vmatpush.msra.mxu0 %v651
      %882 = vmatpush.msra.mxu0 %v647
      %883 = vmatpush.msra.mxu0 %v643
      %884 = vmatpush.msra.mxu0 %v639
      %885 = vmatpush.msra.mxu0 %v635
      %886 = vmatpush.msra.mxu0 %v631
      %887 = vmatpush.msra.mxu0 %v627
      %888 = vmatmul.f32.gmra.mxu0 %v602
      %v889 = vpop.f32.mrf.mxu0
      %v890 = vadd.f32 0.0, %v889
      %891 = vdwg.mxu0
      %892 = vmatpush.msra.mxu0 %v751
      %893 = vmatpush.msra.mxu0 %v747
      %894 = vmatpush.msra.mxu0 %v743
      %895 = vmatpush.msra.mxu0 %v739
      %896 = vmatpush.msra.mxu0 %v735
      %897 = vmatpush.msra.mxu0 %v731
      %898 = vmatpush.msra.mxu0 %v727
      %899 = vmatpush.msra.mxu0 %v723
      %900 = vmatpush.msra.mxu0 %v719
      %901 = vmatpush.msra.mxu0 %v715
      %902 = vmatpush.msra.mxu0 %v711
      %903 = vmatpush.msra.mxu0 %v707
      %904 = vmatpush.msra.mxu0 %v703
      %905 = vmatpush.msra.mxu0 %v699
      %906 = vmatpush.msra.mxu0 %v695
      %907 = vmatpush.msra.mxu0 %v691
      %908 = vmatmul.f32.gmra.mxu0 %v622
      %v909 = vpop.f32.mrf.mxu0
      %v910 = vadd.f32 %v890, %v909
      %911 = vdwg.mxu0
      %v912 = vld [vmem:[%s6] sm:$0xff]
      %v913 = vld [vmem:[%s6 + $0x8] sm:$0xff]
      %v914 = vld [vmem:[%s6 + $0x10] sm:$0xff]
      %v915 = vld [vmem:[%s6 + $0x18] sm:$0xff]
      %v916 = vld [vmem:[%s6 + $0x20] sm:$0xff]
      %v917 = vld [vmem:[%s6 + $0x28] sm:$0xff]
      %v918 = vld [vmem:[%s6 + $0x30] sm:$0xff]
      %v919 = vld [vmem:[%s6 + $0x38] sm:$0xff]
      %v920 = vld [vmem:[%s6 + $0x40] sm:$0xff]
      %v921 = vld [vmem:[%s6 + $0x48] sm:$0xff]
      %v922 = vld [vmem:[%s6 + $0x50] sm:$0xff]
      %v923 = vld [vmem:[%s6 + $0x58] sm:$0xff]
      %v924 = vld [vmem:[%s6 + $0x60] sm:$0xff]
      %v925 = vld [vmem:[%s6 + $0x68] sm:$0xff]
      %v926 = vld [vmem:[%s6 + $0x70] sm:$0xff]
      %v927 = vld [vmem:[%s6 + $0x78] sm:$0xff]
      %v928 = vld [vmem:[%s6 + $0x80] sm:$0xff]
      %v929 = vld [vmem:[%s6 + $0x88] sm:$0xff]
      %v930 = vld [vmem:[%s6 + $0x90] sm:$0xff]
      %v931 = vld [vmem:[%s6 + $0x98] sm:$0xff]
      %v932 = vld [vmem:[%s6 + $0xa0] sm:$0xff]
      %v933 = vld [vmem:[%s6 + $0xa8] sm:$0xff]
      %v934 = vld [vmem:[%s6 + $0xb0] sm:$0xff]
      %v935 = vld [vmem:[%s6 + $0xb8] sm:$0xff]
      %v936 = vld [vmem:[%s6 + $0xc0] sm:$0xff]
      %v937 = vld [vmem:[%s6 + $0xc8] sm:$0xff]
      %v938 = vld [vmem:[%s6 + $0xd0] sm:$0xff]
      %v939 = vld [vmem:[%s6 + $0xd8] sm:$0xff]
      %v940 = vld [vmem:[%s6 + $0xe0] sm:$0xff]
      %v941 = vld [vmem:[%s6 + $0xe8] sm:$0xff]
      %v942 = vld [vmem:[%s6 + $0xf0] sm:$0xff]
      %v943 = vld [vmem:[%s6 + $0xf8] sm:$0xff]
      %v944 = vld [vmem:[%s6 + $0x100] sm:$0xff]
      %v945 = vld [vmem:[%s6 + $0x108] sm:$0xff]
      %v946 = vld [vmem:[%s6 + $0x110] sm:$0xff]
      %v947 = vld [vmem:[%s6 + $0x118] sm:$0xff]
      %v948 = vld [vmem:[%s6 + $0x120] sm:$0xff]
      %v949 = vld [vmem:[%s6 + $0x128] sm:$0xff]
      %v950 = vld [vmem:[%s6 + $0x130] sm:$0xff]
      %v951 = vld [vmem:[%s6 + $0x138] sm:$0xff]
      %v952 = vld [vmem:[%s6 + $0x140] sm:$0xff]
      %v953 = vld [vmem:[%s6 + $0x148] sm:$0xff]
      %v954 = vld [vmem:[%s6 + $0x150] sm:$0xff]
      %v955 = vld [vmem:[%s6 + $0x158] sm:$0xff]
      %v956 = vld [vmem:[%s6 + $0x160] sm:$0xff]
      %v957 = vld [vmem:[%s6 + $0x168] sm:$0xff]
      %v958 = vld [vmem:[%s6 + $0x170] sm:$0xff]
      %v959 = vld [vmem:[%s6 + $0x178] sm:$0xff]
      %v960 = vld [vmem:[%s6 + $0x180] sm:$0xff]
      %v961 = vld [vmem:[%s6 + $0x188] sm:$0xff]
      %v962 = vld [vmem:[%s6 + $0x190] sm:$0xff]
      %v963 = vld [vmem:[%s6 + $0x198] sm:$0xff]
      %v964 = vld [vmem:[%s6 + $0x1a0] sm:$0xff]
      %v965 = vld [vmem:[%s6 + $0x1a8] sm:$0xff]
      %v966 = vld [vmem:[%s6 + $0x1b0] sm:$0xff]
      %v967 = vld [vmem:[%s6 + $0x1b8] sm:$0xff]
      %v968 = vld [vmem:[%s6 + $0x1c0] sm:$0xff]
      %v969 = vld [vmem:[%s6 + $0x1c8] sm:$0xff]
      %v970 = vld [vmem:[%s6 + $0x1d0] sm:$0xff]
      %v971 = vld [vmem:[%s6 + $0x1d8] sm:$0xff]
      %v972 = vld [vmem:[%s6 + $0x1e0] sm:$0xff]
      %v973 = vld [vmem:[%s6 + $0x1e8] sm:$0xff]
      %v974 = vld [vmem:[%s6 + $0x1f0] sm:$0xff]
      %v975 = vld [vmem:[%s6 + $0x1f8] sm:$0xff]
      %v976 = vld [vmem:[%s6 + $0x200] sm:$0xff]
      %v977 = vld [vmem:[%s6 + $0x208] sm:$0xff]
      %v978 = vld [vmem:[%s6 + $0x210] sm:$0xff]
      %v979 = vld [vmem:[%s6 + $0x218] sm:$0xff]
      %v980 = vld [vmem:[%s6 + $0x220] sm:$0xff]
      %v981 = vld [vmem:[%s6 + $0x228] sm:$0xff]
      %v982 = vld [vmem:[%s6 + $0x230] sm:$0xff]
      %v983 = vld [vmem:[%s6 + $0x238] sm:$0xff]
      %v984 = vld [vmem:[%s6 + $0x240] sm:$0xff]
      %v985 = vld [vmem:[%s6 + $0x248] sm:$0xff]
      %v986 = vld [vmem:[%s6 + $0x250] sm:$0xff]
      %v987 = vld [vmem:[%s6 + $0x258] sm:$0xff]
      %v988 = vld [vmem:[%s6 + $0x260] sm:$0xff]
      %v989 = vld [vmem:[%s6 + $0x268] sm:$0xff]
      %v990 = vld [vmem:[%s6 + $0x270] sm:$0xff]
      %v991 = vld [vmem:[%s6 + $0x278] sm:$0xff]
      %v992 = vld [vmem:[%s6 + $0x280] sm:$0xff]
      %v993 = vld [vmem:[%s6 + $0x288] sm:$0xff]
      %v994 = vld [vmem:[%s6 + $0x290] sm:$0xff]
      %v995 = vld [vmem:[%s6 + $0x298] sm:$0xff]
      %v996 = vld [vmem:[%s6 + $0x2a0] sm:$0xff]
      %v997 = vld [vmem:[%s6 + $0x2a8] sm:$0xff]
      %v998 = vld [vmem:[%s6 + $0x2b0] sm:$0xff]
      %v999 = vld [vmem:[%s6 + $0x2b8] sm:$0xff]
      %v1000 = vld [vmem:[%s6 + $0x2c0] sm:$0xff]
      %v1001 = vld [vmem:[%s6 + $0x2c8] sm:$0xff]
      %v1002 = vld [vmem:[%s6 + $0x2d0] sm:$0xff]
      %v1003 = vld [vmem:[%s6 + $0x2d8] sm:$0xff]
      %v1004 = vld [vmem:[%s6 + $0x2e0] sm:$0xff]
      %v1005 = vld [vmem:[%s6 + $0x2e8] sm:$0xff]
      %v1006 = vld [vmem:[%s6 + $0x2f0] sm:$0xff]
      %v1007 = vld [vmem:[%s6 + $0x2f8] sm:$0xff]
      %v1008 = vld [vmem:[%s6 + $0x300] sm:$0xff]
      %v1009 = vld [vmem:[%s6 + $0x308] sm:$0xff]
      %v1010 = vld [vmem:[%s6 + $0x310] sm:$0xff]
      %v1011 = vld [vmem:[%s6 + $0x318] sm:$0xff]
      %v1012 = vld [vmem:[%s6 + $0x320] sm:$0xff]
      %v1013 = vld [vmem:[%s6 + $0x328] sm:$0xff]
      %v1014 = vld [vmem:[%s6 + $0x330] sm:$0xff]
      %v1015 = vld [vmem:[%s6 + $0x338] sm:$0xff]
      %v1016 = vld [vmem:[%s6 + $0x340] sm:$0xff]
      %v1017 = vld [vmem:[%s6 + $0x348] sm:$0xff]
      %v1018 = vld [vmem:[%s6 + $0x350] sm:$0xff]
      %v1019 = vld [vmem:[%s6 + $0x358] sm:$0xff]
      %v1020 = vld [vmem:[%s6 + $0x360] sm:$0xff]
      %v1021 = vld [vmem:[%s6 + $0x368] sm:$0xff]
      %v1022 = vld [vmem:[%s6 + $0x370] sm:$0xff]
      %v1023 = vld [vmem:[%s6 + $0x378] sm:$0xff]
      %v1024 = vld [vmem:[%s6 + $0x380] sm:$0xff]
      %v1025 = vld [vmem:[%s6 + $0x388] sm:$0xff]
      %v1026 = vld [vmem:[%s6 + $0x390] sm:$0xff]
      %v1027 = vld [vmem:[%s6 + $0x398] sm:$0xff]
      %v1028 = vld [vmem:[%s6 + $0x3a0] sm:$0xff]
      %v1029 = vld [vmem:[%s6 + $0x3a8] sm:$0xff]
      %v1030 = vld [vmem:[%s6 + $0x3b0] sm:$0xff]
      %v1031 = vld [vmem:[%s6 + $0x3b8] sm:$0xff]
      %v1032 = vld [vmem:[%s6 + $0x3c0] sm:$0xff]
      %v1033 = vld [vmem:[%s6 + $0x3c8] sm:$0xff]
      %v1034 = vld [vmem:[%s6 + $0x3d0] sm:$0xff]
      %v1035 = vld [vmem:[%s6 + $0x3d8] sm:$0xff]
      %v1036 = vld [vmem:[%s6 + $0x3e0] sm:$0xff]
      %v1037 = vld [vmem:[%s6 + $0x3e8] sm:$0xff]
      %v1038 = vld [vmem:[%s6 + $0x3f0] sm:$0xff]
      %v1039 = vld [vmem:[%s6 + $0x3f8] sm:$0xff]
      %v1040 = vld [vmem:[%s6 + $0x400] sm:$0xff]
      %v1041 = vld [vmem:[%s6 + $0x408] sm:$0xff]
      %v1042 = vld [vmem:[%s6 + $0x410] sm:$0xff]
      %v1043 = vld [vmem:[%s6 + $0x418] sm:$0xff]
      %v1044 = vld [vmem:[%s6 + $0x420] sm:$0xff]
      %v1045 = vld [vmem:[%s6 + $0x428] sm:$0xff]
      %v1046 = vld [vmem:[%s6 + $0x430] sm:$0xff]
      %v1047 = vld [vmem:[%s6 + $0x438] sm:$0xff]
      %v1048 = vld [vmem:[%s6 + $0x440] sm:$0xff]
      %v1049 = vld [vmem:[%s6 + $0x448] sm:$0xff]
      %v1050 = vld [vmem:[%s6 + $0x450] sm:$0xff]
      %v1051 = vld [vmem:[%s6 + $0x458] sm:$0xff]
      %v1052 = vld [vmem:[%s6 + $0x460] sm:$0xff]
      %v1053 = vld [vmem:[%s6 + $0x468] sm:$0xff]
      %v1054 = vld [vmem:[%s6 + $0x470] sm:$0xff]
      %v1055 = vld [vmem:[%s6 + $0x478] sm:$0xff]
      %v1056 = vld [vmem:[%s6 + $0x480] sm:$0xff]
      %v1057 = vld [vmem:[%s6 + $0x488] sm:$0xff]
      %v1058 = vld [vmem:[%s6 + $0x490] sm:$0xff]
      %v1059 = vld [vmem:[%s6 + $0x498] sm:$0xff]
      %v1060 = vld [vmem:[%s6 + $0x4a0] sm:$0xff]
      %v1061 = vld [vmem:[%s6 + $0x4a8] sm:$0xff]
      %v1062 = vld [vmem:[%s6 + $0x4b0] sm:$0xff]
      %v1063 = vld [vmem:[%s6 + $0x4b8] sm:$0xff]
      %v1064 = vld [vmem:[%s6 + $0x4c0] sm:$0xff]
      %v1065 = vld [vmem:[%s6 + $0x4c8] sm:$0xff]
      %v1066 = vld [vmem:[%s6 + $0x4d0] sm:$0xff]
      %v1067 = vld [vmem:[%s6 + $0x4d8] sm:$0xff]
      %v1068 = vld [vmem:[%s6 + $0x4e0] sm:$0xff]
      %v1069 = vld [vmem:[%s6 + $0x4e8] sm:$0xff]
      %v1070 = vld [vmem:[%s6 + $0x4f0] sm:$0xff]
      %v1071 = vld [vmem:[%s6 + $0x4f8] sm:$0xff]
      %v1072 = vld [vmem:[%s6 + $0x500] sm:$0xff]
      %v1073 = vld [vmem:[%s6 + $0x508] sm:$0xff]
      %v1074 = vld [vmem:[%s6 + $0x510] sm:$0xff]
      %v1075 = vld [vmem:[%s6 + $0x518] sm:$0xff]
      %v1076 = vld [vmem:[%s6 + $0x520] sm:$0xff]
      %v1077 = vld [vmem:[%s6 + $0x528] sm:$0xff]
      %v1078 = vld [vmem:[%s6 + $0x530] sm:$0xff]
      %v1079 = vld [vmem:[%s6 + $0x538] sm:$0xff]
      %v1080 = vld [vmem:[%s6 + $0x540] sm:$0xff]
      %v1081 = vld [vmem:[%s6 + $0x548] sm:$0xff]
      %v1082 = vld [vmem:[%s6 + $0x550] sm:$0xff]
      %v1083 = vld [vmem:[%s6 + $0x558] sm:$0xff]
      %v1084 = vld [vmem:[%s6 + $0x560] sm:$0xff]
      %v1085 = vld [vmem:[%s6 + $0x568] sm:$0xff]
      %v1086 = vld [vmem:[%s6 + $0x570] sm:$0xff]
      %v1087 = vld [vmem:[%s6 + $0x578] sm:$0xff]
      %v1088 = vld [vmem:[%s6 + $0x580] sm:$0xff]
      %v1089 = vld [vmem:[%s6 + $0x588] sm:$0xff]
      %v1090 = vld [vmem:[%s6 + $0x590] sm:$0xff]
      %v1091 = vld [vmem:[%s6 + $0x598] sm:$0xff]
      %v1092 = vld [vmem:[%s6 + $0x5a0] sm:$0xff]
      %v1093 = vld [vmem:[%s6 + $0x5a8] sm:$0xff]
      %v1094 = vld [vmem:[%s6 + $0x5b0] sm:$0xff]
      %v1095 = vld [vmem:[%s6 + $0x5b8] sm:$0xff]
      %v1096 = vld [vmem:[%s6 + $0x5c0] sm:$0xff]
      %v1097 = vld [vmem:[%s6 + $0x5c8] sm:$0xff]
      %v1098 = vld [vmem:[%s6 + $0x5d0] sm:$0xff]
      %v1099 = vld [vmem:[%s6 + $0x5d8] sm:$0xff]
      %v1100 = vld [vmem:[%s6 + $0x5e0] sm:$0xff]
      %v1101 = vld [vmem:[%s6 + $0x5e8] sm:$0xff]
      %v1102 = vld [vmem:[%s6 + $0x5f0] sm:$0xff]
      %v1103 = vld [vmem:[%s6 + $0x5f8] sm:$0xff]
      %v1104 = vld [vmem:[%s6 + $0x600] sm:$0xff]
      %v1105 = vld [vmem:[%s6 + $0x608] sm:$0xff]
      %v1106 = vld [vmem:[%s6 + $0x610] sm:$0xff]
      %v1107 = vld [vmem:[%s6 + $0x618] sm:$0xff]
      %v1108 = vld [vmem:[%s6 + $0x620] sm:$0xff]
      %v1109 = vld [vmem:[%s6 + $0x628] sm:$0xff]
      %v1110 = vld [vmem:[%s6 + $0x630] sm:$0xff]
      %v1111 = vld [vmem:[%s6 + $0x638] sm:$0xff]
      %v1112 = vld [vmem:[%s6 + $0x640] sm:$0xff]
      %v1113 = vld [vmem:[%s6 + $0x648] sm:$0xff]
      %v1114 = vld [vmem:[%s6 + $0x650] sm:$0xff]
      %v1115 = vld [vmem:[%s6 + $0x658] sm:$0xff]
      %v1116 = vld [vmem:[%s6 + $0x660] sm:$0xff]
      %v1117 = vld [vmem:[%s6 + $0x668] sm:$0xff]
      %v1118 = vld [vmem:[%s6 + $0x670] sm:$0xff]
      %v1119 = vld [vmem:[%s6 + $0x678] sm:$0xff]
      %v1120 = vld [vmem:[%s6 + $0x680] sm:$0xff]
      %v1121 = vld [vmem:[%s6 + $0x688] sm:$0xff]
      %v1122 = vld [vmem:[%s6 + $0x690] sm:$0xff]
      %v1123 = vld [vmem:[%s6 + $0x698] sm:$0xff]
      %v1124 = vld [vmem:[%s6 + $0x6a0] sm:$0xff]
      %v1125 = vld [vmem:[%s6 + $0x6a8] sm:$0xff]
      %v1126 = vld [vmem:[%s6 + $0x6b0] sm:$0xff]
      %v1127 = vld [vmem:[%s6 + $0x6b8] sm:$0xff]
      %v1128 = vld [vmem:[%s6 + $0x6c0] sm:$0xff]
      %v1129 = vld [vmem:[%s6 + $0x6c8] sm:$0xff]
      %v1130 = vld [vmem:[%s6 + $0x6d0] sm:$0xff]
      %v1131 = vld [vmem:[%s6 + $0x6d8] sm:$0xff]
      %v1132 = vld [vmem:[%s6 + $0x6e0] sm:$0xff]
      %v1133 = vld [vmem:[%s6 + $0x6e8] sm:$0xff]
      %v1134 = vld [vmem:[%s6 + $0x6f0] sm:$0xff]
      %v1135 = vld [vmem:[%s6 + $0x6f8] sm:$0xff]
      %v1136 = vld [vmem:[%s6 + $0x700] sm:$0xff]
      %v1137 = vld [vmem:[%s6 + $0x708] sm:$0xff]
      %v1138 = vld [vmem:[%s6 + $0x710] sm:$0xff]
      %v1139 = vld [vmem:[%s6 + $0x718] sm:$0xff]
      %v1140 = vld [vmem:[%s6 + $0x720] sm:$0xff]
      %v1141 = vld [vmem:[%s6 + $0x728] sm:$0xff]
      %v1142 = vld [vmem:[%s6 + $0x730] sm:$0xff]
      %v1143 = vld [vmem:[%s6 + $0x738] sm:$0xff]
      %v1144 = vld [vmem:[%s6 + $0x740] sm:$0xff]
      %v1145 = vld [vmem:[%s6 + $0x748] sm:$0xff]
      %v1146 = vld [vmem:[%s6 + $0x750] sm:$0xff]
      %v1147 = vld [vmem:[%s6 + $0x758] sm:$0xff]
      %v1148 = vld [vmem:[%s6 + $0x760] sm:$0xff]
      %v1149 = vld [vmem:[%s6 + $0x768] sm:$0xff]
      %v1150 = vld [vmem:[%s6 + $0x770] sm:$0xff]
      %v1151 = vld [vmem:[%s6 + $0x778] sm:$0xff]
      %v1152 = vld [vmem:[%s6 + $0x780] sm:$0xff]
      %v1153 = vld [vmem:[%s6 + $0x788] sm:$0xff]
      %v1154 = vld [vmem:[%s6 + $0x790] sm:$0xff]
      %v1155 = vld [vmem:[%s6 + $0x798] sm:$0xff]
      %v1156 = vld [vmem:[%s6 + $0x7a0] sm:$0xff]
      %v1157 = vld [vmem:[%s6 + $0x7a8] sm:$0xff]
      %v1158 = vld [vmem:[%s6 + $0x7b0] sm:$0xff]
      %v1159 = vld [vmem:[%s6 + $0x7b8] sm:$0xff]
      %v1160 = vld [vmem:[%s6 + $0x7c0] sm:$0xff]
      %v1161 = vld [vmem:[%s6 + $0x7c8] sm:$0xff]
      %v1162 = vld [vmem:[%s6 + $0x7d0] sm:$0xff]
      %v1163 = vld [vmem:[%s6 + $0x7d8] sm:$0xff]
      %v1164 = vld [vmem:[%s6 + $0x7e0] sm:$0xff]
      %v1165 = vld [vmem:[%s6 + $0x7e8] sm:$0xff]
      %v1166 = vld [vmem:[%s6 + $0x7f0] sm:$0xff]
      %v1167 = vld [vmem:[%s6 + $0x7f8] sm:$0xff]
      %v1168 = vld [vmem:[%s6 + $0x800] sm:$0xff]
      %v1169 = vld [vmem:[%s6 + $0x808] sm:$0xff]
      %v1170 = vld [vmem:[%s6 + $0x810] sm:$0xff]
      %v1171 = vld [vmem:[%s6 + $0x818] sm:$0xff]
      %v1172 = vld [vmem:[%s6 + $0x820] sm:$0xff]
      %v1173 = vld [vmem:[%s6 + $0x828] sm:$0xff]
      %v1174 = vld [vmem:[%s6 + $0x830] sm:$0xff]
      %v1175 = vld [vmem:[%s6 + $0x838] sm:$0xff]
      %v1176 = vld [vmem:[%s6 + $0x840] sm:$0xff]
      %v1177 = vld [vmem:[%s6 + $0x848] sm:$0xff]
      %v1178 = vld [vmem:[%s6 + $0x850] sm:$0xff]
      %v1179 = vld [vmem:[%s6 + $0x858] sm:$0xff]
      %v1180 = vld [vmem:[%s6 + $0x860] sm:$0xff]
      %v1181 = vld [vmem:[%s6 + $0x868] sm:$0xff]
      %v1182 = vld [vmem:[%s6 + $0x870] sm:$0xff]
      %v1183 = vld [vmem:[%s6 + $0x878] sm:$0xff]
      %v1184 = vld [vmem:[%s6 + $0x880] sm:$0xff]
      %v1185 = vld [vmem:[%s6 + $0x888] sm:$0xff]
      %v1186 = vld [vmem:[%s6 + $0x890] sm:$0xff]
      %v1187 = vld [vmem:[%s6 + $0x898] sm:$0xff]
      %v1188 = vld [vmem:[%s6 + $0x8a0] sm:$0xff]
      %v1189 = vld [vmem:[%s6 + $0x8a8] sm:$0xff]
      %v1190 = vld [vmem:[%s6 + $0x8b0] sm:$0xff]
      %v1191 = vld [vmem:[%s6 + $0x8b8] sm:$0xff]
      %v1192 = vld [vmem:[%s6 + $0x8c0] sm:$0xff]
      %v1193 = vld [vmem:[%s6 + $0x8c8] sm:$0xff]
      %v1194 = vld [vmem:[%s6 + $0x8d0] sm:$0xff]
      %v1195 = vld [vmem:[%s6 + $0x8d8] sm:$0xff]
      %v1196 = vld [vmem:[%s6 + $0x8e0] sm:$0xff]
      %v1197 = vld [vmem:[%s6 + $0x8e8] sm:$0xff]
      %v1198 = vld [vmem:[%s6 + $0x8f0] sm:$0xff]
      %v1199 = vld [vmem:[%s6 + $0x8f8] sm:$0xff]
      %v1200 = vld [vmem:[%s6 + $0x900] sm:$0xff]
      %v1201 = vld [vmem:[%s6 + $0x908] sm:$0xff]
      %v1202 = vld [vmem:[%s6 + $0x910] sm:$0xff]
      %v1203 = vld [vmem:[%s6 + $0x918] sm:$0xff]
      %v1204 = vld [vmem:[%s6 + $0x920] sm:$0xff]
      %v1205 = vld [vmem:[%s6 + $0x928] sm:$0xff]
      %v1206 = vld [vmem:[%s6 + $0x930] sm:$0xff]
      %v1207 = vld [vmem:[%s6 + $0x938] sm:$0xff]
      %v1208 = vld [vmem:[%s6 + $0x940] sm:$0xff]
      %v1209 = vld [vmem:[%s6 + $0x948] sm:$0xff]
      %v1210 = vld [vmem:[%s6 + $0x950] sm:$0xff]
      %v1211 = vld [vmem:[%s6 + $0x958] sm:$0xff]
      %v1212 = vld [vmem:[%s6 + $0x960] sm:$0xff]
      %v1213 = vld [vmem:[%s6 + $0x968] sm:$0xff]
      %v1214 = vld [vmem:[%s6 + $0x970] sm:$0xff]
      %v1215 = vld [vmem:[%s6 + $0x978] sm:$0xff]
      %v1216 = vld [vmem:[%s6 + $0x980] sm:$0xff]
      %v1217 = vld [vmem:[%s6 + $0x988] sm:$0xff]
      %v1218 = vld [vmem:[%s6 + $0x990] sm:$0xff]
      %v1219 = vld [vmem:[%s6 + $0x998] sm:$0xff]
      %v1220 = vld [vmem:[%s6 + $0x9a0] sm:$0xff]
      %v1221 = vld [vmem:[%s6 + $0x9a8] sm:$0xff]
      %v1222 = vld [vmem:[%s6 + $0x9b0] sm:$0xff]
      %v1223 = vld [vmem:[%s6 + $0x9b8] sm:$0xff]
      %v1224 = vld [vmem:[%s6 + $0x9c0] sm:$0xff]
      %v1225 = vld [vmem:[%s6 + $0x9c8] sm:$0xff]
      %v1226 = vld [vmem:[%s6 + $0x9d0] sm:$0xff]
      %v1227 = vld [vmem:[%s6 + $0x9d8] sm:$0xff]
      %v1228 = vld [vmem:[%s6 + $0x9e0] sm:$0xff]
      %v1229 = vld [vmem:[%s6 + $0x9e8] sm:$0xff]
      %v1230 = vld [vmem:[%s6 + $0x9f0] sm:$0xff]
      %v1231 = vld [vmem:[%s6 + $0x9f8] sm:$0xff]
      %v1232 = vld [vmem:[%s6 + $0xa00] sm:$0xff]
      %v1233 = vld [vmem:[%s6 + $0xa08] sm:$0xff]
      %v1234 = vld [vmem:[%s6 + $0xa10] sm:$0xff]
      %v1235 = vld [vmem:[%s6 + $0xa18] sm:$0xff]
      %v1236 = vld [vmem:[%s6 + $0xa20] sm:$0xff]
      %v1237 = vld [vmem:[%s6 + $0xa28] sm:$0xff]
      %v1238 = vld [vmem:[%s6 + $0xa30] sm:$0xff]
      %v1239 = vld [vmem:[%s6 + $0xa38] sm:$0xff]
      %v1240 = vld [vmem:[%s6 + $0xa40] sm:$0xff]
      %v1241 = vld [vmem:[%s6 + $0xa48] sm:$0xff]
      %v1242 = vld [vmem:[%s6 + $0xa50] sm:$0xff]
      %v1243 = vld [vmem:[%s6 + $0xa58] sm:$0xff]
      %v1244 = vld [vmem:[%s6 + $0xa60] sm:$0xff]
      %v1245 = vld [vmem:[%s6 + $0xa68] sm:$0xff]
      %v1246 = vld [vmem:[%s6 + $0xa70] sm:$0xff]
      %v1247 = vld [vmem:[%s6 + $0xa78] sm:$0xff]
      %v1248 = vld [vmem:[%s6 + $0xa80] sm:$0xff]
      %v1249 = vld [vmem:[%s6 + $0xa88] sm:$0xff]
      %v1250 = vld [vmem:[%s6 + $0xa90] sm:$0xff]
      %v1251 = vld [vmem:[%s6 + $0xa98] sm:$0xff]
      %v1252 = vld [vmem:[%s6 + $0xaa0] sm:$0xff]
      %v1253 = vld [vmem:[%s6 + $0xaa8] sm:$0xff]
      %v1254 = vld [vmem:[%s6 + $0xab0] sm:$0xff]
      %v1255 = vld [vmem:[%s6 + $0xab8] sm:$0xff]
      %v1256 = vld [vmem:[%s6 + $0xac0] sm:$0xff]
      %v1257 = vld [vmem:[%s6 + $0xac8] sm:$0xff]
      %v1258 = vld [vmem:[%s6 + $0xad0] sm:$0xff]
      %v1259 = vld [vmem:[%s6 + $0xad8] sm:$0xff]
      %v1260 = vld [vmem:[%s6 + $0xae0] sm:$0xff]
      %v1261 = vld [vmem:[%s6 + $0xae8] sm:$0xff]
      %v1262 = vld [vmem:[%s6 + $0xaf0] sm:$0xff]
      %v1263 = vld [vmem:[%s6 + $0xaf8] sm:$0xff]
      %v1264 = vld [vmem:[%s6 + $0xb00] sm:$0xff]
      %v1265 = vld [vmem:[%s6 + $0xb08] sm:$0xff]
      %v1266 = vld [vmem:[%s6 + $0xb10] sm:$0xff]
      %v1267 = vld [vmem:[%s6 + $0xb18] sm:$0xff]
      %v1268 = vld [vmem:[%s6 + $0xb20] sm:$0xff]
      %v1269 = vld [vmem:[%s6 + $0xb28] sm:$0xff]
      %v1270 = vld [vmem:[%s6 + $0xb30] sm:$0xff]
      %v1271 = vld [vmem:[%s6 + $0xb38] sm:$0xff]
      %v1272 = vld [vmem:[%s6 + $0xb40] sm:$0xff]
      %v1273 = vld [vmem:[%s6 + $0xb48] sm:$0xff]
      %v1274 = vld [vmem:[%s6 + $0xb50] sm:$0xff]
      %v1275 = vld [vmem:[%s6 + $0xb58] sm:$0xff]
      %v1276 = vld [vmem:[%s6 + $0xb60] sm:$0xff]
      %v1277 = vld [vmem:[%s6 + $0xb68] sm:$0xff]
      %v1278 = vld [vmem:[%s6 + $0xb70] sm:$0xff]
      %v1279 = vld [vmem:[%s6 + $0xb78] sm:$0xff]
      %v1280 = vld [vmem:[%s6 + $0xb80] sm:$0xff]
      %v1281 = vld [vmem:[%s6 + $0xb88] sm:$0xff]
      %v1282 = vld [vmem:[%s6 + $0xb90] sm:$0xff]
      %v1283 = vld [vmem:[%s6 + $0xb98] sm:$0xff]
      %v1284 = vld [vmem:[%s6 + $0xba0] sm:$0xff]
      %v1285 = vld [vmem:[%s6 + $0xba8] sm:$0xff]
      %v1286 = vld [vmem:[%s6 + $0xbb0] sm:$0xff]
      %v1287 = vld [vmem:[%s6 + $0xbb8] sm:$0xff]
      %v1288 = vld [vmem:[%s6 + $0xbc0] sm:$0xff]
      %v1289 = vld [vmem:[%s6 + $0xbc8] sm:$0xff]
      %v1290 = vld [vmem:[%s6 + $0xbd0] sm:$0xff]
      %v1291 = vld [vmem:[%s6 + $0xbd8] sm:$0xff]
      %v1292 = vld [vmem:[%s6 + $0xbe0] sm:$0xff]
      %v1293 = vld [vmem:[%s6 + $0xbe8] sm:$0xff]
      %v1294 = vld [vmem:[%s6 + $0xbf0] sm:$0xff]
      %v1295 = vld [vmem:[%s6 + $0xbf8] sm:$0xff]
      %v1296 = vld [vmem:[%s6 + $0xc00] sm:$0xff]
      %v1297 = vld [vmem:[%s6 + $0xc08] sm:$0xff]
      %v1298 = vld [vmem:[%s6 + $0xc10] sm:$0xff]
      %v1299 = vld [vmem:[%s6 + $0xc18] sm:$0xff]
      %v1300 = vld [vmem:[%s6 + $0xc20] sm:$0xff]
      %v1301 = vld [vmem:[%s6 + $0xc28] sm:$0xff]
      %v1302 = vld [vmem:[%s6 + $0xc30] sm:$0xff]
      %v1303 = vld [vmem:[%s6 + $0xc38] sm:$0xff]
      %v1304 = vld [vmem:[%s6 + $0xc40] sm:$0xff]
      %v1305 = vld [vmem:[%s6 + $0xc48] sm:$0xff]
      %v1306 = vld [vmem:[%s6 + $0xc50] sm:$0xff]
      %v1307 = vld [vmem:[%s6 + $0xc58] sm:$0xff]
      %v1308 = vld [vmem:[%s6 + $0xc60] sm:$0xff]
      %v1309 = vld [vmem:[%s6 + $0xc68] sm:$0xff]
      %v1310 = vld [vmem:[%s6 + $0xc70] sm:$0xff]
      %v1311 = vld [vmem:[%s6 + $0xc78] sm:$0xff]
      %v1312 = vld [vmem:[%s6 + $0xc80] sm:$0xff]
      %v1313 = vld [vmem:[%s6 + $0xc88] sm:$0xff]
      %v1314 = vld [vmem:[%s6 + $0xc90] sm:$0xff]
      %v1315 = vld [vmem:[%s6 + $0xc98] sm:$0xff]
      %v1316 = vld [vmem:[%s6 + $0xca0] sm:$0xff]
      %v1317 = vld [vmem:[%s6 + $0xca8] sm:$0xff]
      %v1318 = vld [vmem:[%s6 + $0xcb0] sm:$0xff]
      %v1319 = vld [vmem:[%s6 + $0xcb8] sm:$0xff]
      %v1320 = vld [vmem:[%s6 + $0xcc0] sm:$0xff]
      %v1321 = vld [vmem:[%s6 + $0xcc8] sm:$0xff]
      %v1322 = vld [vmem:[%s6 + $0xcd0] sm:$0xff]
      %v1323 = vld [vmem:[%s6 + $0xcd8] sm:$0xff]
      %v1324 = vld [vmem:[%s6 + $0xce0] sm:$0xff]
      %v1325 = vld [vmem:[%s6 + $0xce8] sm:$0xff]
      %v1326 = vld [vmem:[%s6 + $0xcf0] sm:$0xff]
      %v1327 = vld [vmem:[%s6 + $0xcf8] sm:$0xff]
      %v1328 = vld [vmem:[%s6 + $0xd00] sm:$0xff]
      %v1329 = vld [vmem:[%s6 + $0xd08] sm:$0xff]
      %v1330 = vld [vmem:[%s6 + $0xd10] sm:$0xff]
      %v1331 = vld [vmem:[%s6 + $0xd18] sm:$0xff]
      %v1332 = vld [vmem:[%s6 + $0xd20] sm:$0xff]
      %v1333 = vld [vmem:[%s6 + $0xd28] sm:$0xff]
      %v1334 = vld [vmem:[%s6 + $0xd30] sm:$0xff]
      %v1335 = vld [vmem:[%s6 + $0xd38] sm:$0xff]
      %v1336 = vld [vmem:[%s6 + $0xd40] sm:$0xff]
      %v1337 = vld [vmem:[%s6 + $0xd48] sm:$0xff]
      %v1338 = vld [vmem:[%s6 + $0xd50] sm:$0xff]
      %v1339 = vld [vmem:[%s6 + $0xd58] sm:$0xff]
      %v1340 = vld [vmem:[%s6 + $0xd60] sm:$0xff]
      %v1341 = vld [vmem:[%s6 + $0xd68] sm:$0xff]
      %v1342 = vld [vmem:[%s6 + $0xd70] sm:$0xff]
      %v1343 = vld [vmem:[%s6 + $0xd78] sm:$0xff]
      %v1344 = vld [vmem:[%s6 + $0xd80] sm:$0xff]
      %v1345 = vld [vmem:[%s6 + $0xd88] sm:$0xff]
      %v1346 = vld [vmem:[%s6 + $0xd90] sm:$0xff]
      %v1347 = vld [vmem:[%s6 + $0xd98] sm:$0xff]
      %v1348 = vld [vmem:[%s6 + $0xda0] sm:$0xff]
      %v1349 = vld [vmem:[%s6 + $0xda8] sm:$0xff]
      %v1350 = vld [vmem:[%s6 + $0xdb0] sm:$0xff]
      %v1351 = vld [vmem:[%s6 + $0xdb8] sm:$0xff]
      %v1352 = vld [vmem:[%s6 + $0xdc0] sm:$0xff]
      %v1353 = vld [vmem:[%s6 + $0xdc8] sm:$0xff]
      %v1354 = vld [vmem:[%s6 + $0xdd0] sm:$0xff]
      %v1355 = vld [vmem:[%s6 + $0xdd8] sm:$0xff]
      %v1356 = vld [vmem:[%s6 + $0xde0] sm:$0xff]
      %v1357 = vld [vmem:[%s6 + $0xde8] sm:$0xff]
      %v1358 = vld [vmem:[%s6 + $0xdf0] sm:$0xff]
      %v1359 = vld [vmem:[%s6 + $0xdf8] sm:$0xff]
      %v1360 = vld [vmem:[%s6 + $0xe00] sm:$0xff]
      %v1361 = vld [vmem:[%s6 + $0xe08] sm:$0xff]
      %v1362 = vld [vmem:[%s6 + $0xe10] sm:$0xff]
      %v1363 = vld [vmem:[%s6 + $0xe18] sm:$0xff]
      %v1364 = vld [vmem:[%s6 + $0xe20] sm:$0xff]
      %v1365 = vld [vmem:[%s6 + $0xe28] sm:$0xff]
      %v1366 = vld [vmem:[%s6 + $0xe30] sm:$0xff]
      %v1367 = vld [vmem:[%s6 + $0xe38] sm:$0xff]
      %v1368 = vld [vmem:[%s6 + $0xe40] sm:$0xff]
      %v1369 = vld [vmem:[%s6 + $0xe48] sm:$0xff]
      %v1370 = vld [vmem:[%s6 + $0xe50] sm:$0xff]
      %v1371 = vld [vmem:[%s6 + $0xe58] sm:$0xff]
      %v1372 = vld [vmem:[%s6 + $0xe60] sm:$0xff]
      %v1373 = vld [vmem:[%s6 + $0xe68] sm:$0xff]
      %v1374 = vld [vmem:[%s6 + $0xe70] sm:$0xff]
      %v1375 = vld [vmem:[%s6 + $0xe78] sm:$0xff]
      %v1376 = vld [vmem:[%s6 + $0xe80] sm:$0xff]
      %v1377 = vld [vmem:[%s6 + $0xe88] sm:$0xff]
      %v1378 = vld [vmem:[%s6 + $0xe90] sm:$0xff]
      %v1379 = vld [vmem:[%s6 + $0xe98] sm:$0xff]
      %v1380 = vld [vmem:[%s6 + $0xea0] sm:$0xff]
      %v1381 = vld [vmem:[%s6 + $0xea8] sm:$0xff]
      %v1382 = vld [vmem:[%s6 + $0xeb0] sm:$0xff]
      %v1383 = vld [vmem:[%s6 + $0xeb8] sm:$0xff]
      %v1384 = vld [vmem:[%s6 + $0xec0] sm:$0xff]
      %v1385 = vld [vmem:[%s6 + $0xec8] sm:$0xff]
      %v1386 = vld [vmem:[%s6 + $0xed0] sm:$0xff]
      %v1387 = vld [vmem:[%s6 + $0xed8] sm:$0xff]
      %v1388 = vld [vmem:[%s6 + $0xee0] sm:$0xff]
      %v1389 = vld [vmem:[%s6 + $0xee8] sm:$0xff]
      %v1390 = vld [vmem:[%s6 + $0xef0] sm:$0xff]
      %v1391 = vld [vmem:[%s6 + $0xef8] sm:$0xff]
      %v1392 = vld [vmem:[%s6 + $0xf00] sm:$0xff]
      %v1393 = vld [vmem:[%s6 + $0xf08] sm:$0xff]
      %v1394 = vld [vmem:[%s6 + $0xf10] sm:$0xff]
      %v1395 = vld [vmem:[%s6 + $0xf18] sm:$0xff]
      %v1396 = vld [vmem:[%s6 + $0xf20] sm:$0xff]
      %v1397 = vld [vmem:[%s6 + $0xf28] sm:$0xff]
      %v1398 = vld [vmem:[%s6 + $0xf30] sm:$0xff]
      %v1399 = vld [vmem:[%s6 + $0xf38] sm:$0xff]
      %v1400 = vld [vmem:[%s6 + $0xf40] sm:$0xff]
      %v1401 = vld [vmem:[%s6 + $0xf48] sm:$0xff]
      %v1402 = vld [vmem:[%s6 + $0xf50] sm:$0xff]
      %v1403 = vld [vmem:[%s6 + $0xf58] sm:$0xff]
      %v1404 = vld [vmem:[%s6 + $0xf60] sm:$0xff]
      %v1405 = vld [vmem:[%s6 + $0xf68] sm:$0xff]
      %v1406 = vld [vmem:[%s6 + $0xf70] sm:$0xff]
      %v1407 = vld [vmem:[%s6 + $0xf78] sm:$0xff]
      %v1408 = vld [vmem:[%s6 + $0xf80] sm:$0xff]
      %v1409 = vld [vmem:[%s6 + $0xf88] sm:$0xff]
      %v1410 = vld [vmem:[%s6 + $0xf90] sm:$0xff]
      %v1411 = vld [vmem:[%s6 + $0xf98] sm:$0xff]
      %v1412 = vld [vmem:[%s6 + $0xfa0] sm:$0xff]
      %v1413 = vld [vmem:[%s6 + $0xfa8] sm:$0xff]
      %v1414 = vld [vmem:[%s6 + $0xfb0] sm:$0xff]
      %v1415 = vld [vmem:[%s6 + $0xfb8] sm:$0xff]
      %v1416 = vld [vmem:[%s6 + $0xfc0] sm:$0xff]
      %v1417 = vld [vmem:[%s6 + $0xfc8] sm:$0xff]
      %v1418 = vld [vmem:[%s6 + $0xfd0] sm:$0xff]
      %v1419 = vld [vmem:[%s6 + $0xfd8] sm:$0xff]
      %v1420 = vld [vmem:[%s6 + $0xfe0] sm:$0xff]
      %v1421 = vld [vmem:[%s6 + $0xfe8] sm:$0xff]
      %v1422 = vld [vmem:[%s6 + $0xff0] sm:$0xff]
      %v1423 = vld [vmem:[%s6 + $0xff8] sm:$0xff]
      %1424 = vmatpush.msra.mxu0 %v1032
      %1425 = vmatpush.msra.mxu0 %v1024
      %1426 = vmatpush.msra.mxu0 %v1016
      %1427 = vmatpush.msra.mxu0 %v1008
      %1428 = vmatpush.msra.mxu0 %v1000
      %1429 = vmatpush.msra.mxu0 %v992
      %1430 = vmatpush.msra.mxu0 %v984
      %1431 = vmatpush.msra.mxu0 %v976
      %1432 = vmatpush.msra.mxu0 %v968
      %1433 = vmatpush.msra.mxu0 %v960
      %1434 = vmatpush.msra.mxu0 %v952
      %1435 = vmatpush.msra.mxu0 %v944
      %1436 = vmatpush.msra.mxu0 %v936
      %1437 = vmatpush.msra.mxu0 %v928
      %1438 = vmatpush.msra.mxu0 %v920
      %1439 = vmatpush.msra.mxu0 %v912
      %1440 = vmatmul.f32.gmra.mxu0 %v790
      %v1441 = vpop.f32.mrf.mxu0
      %v1442 = vadd.f32 0.0, %v1441
      %1443 = vdwg.mxu0
      %1444 = vmatpush.msra.mxu0 %v1160
      %1445 = vmatpush.msra.mxu0 %v1152
      %1446 = vmatpush.msra.mxu0 %v1144
      %1447 = vmatpush.msra.mxu0 %v1136
      %1448 = vmatpush.msra.mxu0 %v1128
      %1449 = vmatpush.msra.mxu0 %v1120
      %1450 = vmatpush.msra.mxu0 %v1112
      %1451 = vmatpush.msra.mxu0 %v1104
      %1452 = vmatpush.msra.mxu0 %v1096
      %1453 = vmatpush.msra.mxu0 %v1088
      %1454 = vmatpush.msra.mxu0 %v1080
      %1455 = vmatpush.msra.mxu0 %v1072
      %1456 = vmatpush.msra.mxu0 %v1064
      %1457 = vmatpush.msra.mxu0 %v1056
      %1458 = vmatpush.msra.mxu0 %v1048
      %1459 = vmatpush.msra.mxu0 %v1040
      %1460 = vmatmul.f32.gmra.mxu0 %v830
      %v1461 = vpop.f32.mrf.mxu0
      %v1462 = vadd.f32 %v1442, %v1461
      %1463 = vdwg.mxu0
      %1464 = vmatpush.msra.mxu0 %v1288
      %1465 = vmatpush.msra.mxu0 %v1280
      %1466 = vmatpush.msra.mxu0 %v1272
      %1467 = vmatpush.msra.mxu0 %v1264
      %1468 = vmatpush.msra.mxu0 %v1256
      %1469 = vmatpush.msra.mxu0 %v1248
      %1470 = vmatpush.msra.mxu0 %v1240
      %1471 = vmatpush.msra.mxu0 %v1232
      %1472 = vmatpush.msra.mxu0 %v1224
      %1473 = vmatpush.msra.mxu0 %v1216
      %1474 = vmatpush.msra.mxu0 %v1208
      %1475 = vmatpush.msra.mxu0 %v1200
      %1476 = vmatpush.msra.mxu0 %v1192
      %1477 = vmatpush.msra.mxu0 %v1184
      %1478 = vmatpush.msra.mxu0 %v1176
      %1479 = vmatpush.msra.mxu0 %v1168
      %1480 = vmatmul.f32.gmra.mxu0 %v870
      %v1481 = vpop.f32.mrf.mxu0
      %v1482 = vadd.f32 %v1462, %v1481
      %1483 = vdwg.mxu0
      %1484 = vmatpush.msra.mxu0 %v1416
      %1485 = vmatpush.msra.mxu0 %v1408
      %1486 = vmatpush.msra.mxu0 %v1400
      %1487 = vmatpush.msra.mxu0 %v1392
      %1488 = vmatpush.msra.mxu0 %v1384
      %1489 = vmatpush.msra.mxu0 %v1376
      %1490 = vmatpush.msra.mxu0 %v1368
      %1491 = vmatpush.msra.mxu0 %v1360
      %1492 = vmatpush.msra.mxu0 %v1352
      %1493 = vmatpush.msra.mxu0 %v1344
      %1494 = vmatpush.msra.mxu0 %v1336
      %1495 = vmatpush.msra.mxu0 %v1328
      %1496 = vmatpush.msra.mxu0 %v1320
      %1497 = vmatpush.msra.mxu0 %v1312
      %1498 = vmatpush.msra.mxu0 %v1304
      %1499 = vmatpush.msra.mxu0 %v1296
      %1500 = vmatmul.f32.gmra.mxu0 %v910
      %v1501 = vpop.f32.mrf.mxu0
      %v1502 = vadd.f32 %v1482, %v1501
      %1503 = vdwg.mxu0
      %1504 = vmatpush.msra.mxu0 %v1033
      %1505 = vmatpush.msra.mxu0 %v1025
      %1506 = vmatpush.msra.mxu0 %v1017
      %1507 = vmatpush.msra.mxu0 %v1009
      %1508 = vmatpush.msra.mxu0 %v1001
      %1509 = vmatpush.msra.mxu0 %v993
      %1510 = vmatpush.msra.mxu0 %v985
      %1511 = vmatpush.msra.mxu0 %v977
      %1512 = vmatpush.msra.mxu0 %v969
      %1513 = vmatpush.msra.mxu0 %v961
      %1514 = vmatpush.msra.mxu0 %v953
      %1515 = vmatpush.msra.mxu0 %v945
      %1516 = vmatpush.msra.mxu0 %v937
      %1517 = vmatpush.msra.mxu0 %v929
      %1518 = vmatpush.msra.mxu0 %v921
      %1519 = vmatpush.msra.mxu0 %v913
      %1520 = vmatmul.f32.gmra.mxu0 %v790
      %v1521 = vpop.f32.mrf.mxu0
      %v1522 = vadd.f32 0.0, %v1521
      %1523 = vdwg.mxu0
      %1524 = vmatpush.msra.mxu0 %v1161
      %1525 = vmatpush.msra.mxu0 %v1153
      %1526 = vmatpush.msra.mxu0 %v1145
      %1527 = vmatpush.msra.mxu0 %v1137
      %1528 = vmatpush.msra.mxu0 %v1129
      %1529 = vmatpush.msra.mxu0 %v1121
      %1530 = vmatpush.msra.mxu0 %v1113
      %1531 = vmatpush.msra.mxu0 %v1105
      %1532 = vmatpush.msra.mxu0 %v1097
      %1533 = vmatpush.msra.mxu0 %v1089
      %1534 = vmatpush.msra.mxu0 %v1081
      %1535 = vmatpush.msra.mxu0 %v1073
      %1536 = vmatpush.msra.mxu0 %v1065
      %1537 = vmatpush.msra.mxu0 %v1057
      %1538 = vmatpush.msra.mxu0 %v1049
      %1539 = vmatpush.msra.mxu0 %v1041
      %1540 = vmatmul.f32.gmra.mxu0 %v830
      %v1541 = vpop.f32.mrf.mxu0
      %v1542 = vadd.f32 %v1522, %v1541
      %1543 = vdwg.mxu0
      %1544 = vmatpush.msra.mxu0 %v1289
      %1545 = vmatpush.msra.mxu0 %v1281
      %1546 = vmatpush.msra.mxu0 %v1273
      %1547 = vmatpush.msra.mxu0 %v1265
      %1548 = vmatpush.msra.mxu0 %v1257
      %1549 = vmatpush.msra.mxu0 %v1249
      %1550 = vmatpush.msra.mxu0 %v1241
      %1551 = vmatpush.msra.mxu0 %v1233
      %1552 = vmatpush.msra.mxu0 %v1225
      %1553 = vmatpush.msra.mxu0 %v1217
      %1554 = vmatpush.msra.mxu0 %v1209
      %1555 = vmatpush.msra.mxu0 %v1201
      %1556 = vmatpush.msra.mxu0 %v1193
      %1557 = vmatpush.msra.mxu0 %v1185
      %1558 = vmatpush.msra.mxu0 %v1177
      %1559 = vmatpush.msra.mxu0 %v1169
      %1560 = vmatmul.f32.gmra.mxu0 %v870
      %v1561 = vpop.f32.mrf.mxu0
      %v1562 = vadd.f32 %v1542, %v1561
      %1563 = vdwg.mxu0
      %1564 = vmatpush.msra.mxu0 %v1417
      %1565 = vmatpush.msra.mxu0 %v1409
      %1566 = vmatpush.msra.mxu0 %v1401
      %1567 = vmatpush.msra.mxu0 %v1393
      %1568 = vmatpush.msra.mxu0 %v1385
      %1569 = vmatpush.msra.mxu0 %v1377
      %1570 = vmatpush.msra.mxu0 %v1369
      %1571 = vmatpush.msra.mxu0 %v1361
      %1572 = vmatpush.msra.mxu0 %v1353
      %1573 = vmatpush.msra.mxu0 %v1345
      %1574 = vmatpush.msra.mxu0 %v1337
      %1575 = vmatpush.msra.mxu0 %v1329
      %1576 = vmatpush.msra.mxu0 %v1321
      %1577 = vmatpush.msra.mxu0 %v1313
      %1578 = vmatpush.msra.mxu0 %v1305
      %1579 = vmatpush.msra.mxu0 %v1297
      %1580 = vmatmul.f32.gmra.mxu0 %v910
      %v1581 = vpop.f32.mrf.mxu0
      %v1582 = vadd.f32 %v1562, %v1581
      %1583 = vdwg.mxu0
      %1584 = vmatpush.msra.mxu0 %v1034
      %1585 = vmatpush.msra.mxu0 %v1026
      %1586 = vmatpush.msra.mxu0 %v1018
      %1587 = vmatpush.msra.mxu0 %v1010
      %1588 = vmatpush.msra.mxu0 %v1002
      %1589 = vmatpush.msra.mxu0 %v994
      %1590 = vmatpush.msra.mxu0 %v986
      %1591 = vmatpush.msra.mxu0 %v978
      %1592 = vmatpush.msra.mxu0 %v970
      %1593 = vmatpush.msra.mxu0 %v962
      %1594 = vmatpush.msra.mxu0 %v954
      %1595 = vmatpush.msra.mxu0 %v946
      %1596 = vmatpush.msra.mxu0 %v938
      %1597 = vmatpush.msra.mxu0 %v930
      %1598 = vmatpush.msra.mxu0 %v922
      %1599 = vmatpush.msra.mxu0 %v914
      %1600 = vmatmul.f32.gmra.mxu0 %v790
      %v1601 = vpop.f32.mrf.mxu0
      %v1602 = vadd.f32 0.0, %v1601
      %1603 = vdwg.mxu0
      %1604 = vmatpush.msra.mxu0 %v1162
      %1605 = vmatpush.msra.mxu0 %v1154
      %1606 = vmatpush.msra.mxu0 %v1146
      %1607 = vmatpush.msra.mxu0 %v1138
      %1608 = vmatpush.msra.mxu0 %v1130
      %1609 = vmatpush.msra.mxu0 %v1122
      %1610 = vmatpush.msra.mxu0 %v1114
      %1611 = vmatpush.msra.mxu0 %v1106
      %1612 = vmatpush.msra.mxu0 %v1098
      %1613 = vmatpush.msra.mxu0 %v1090
      %1614 = vmatpush.msra.mxu0 %v1082
      %1615 = vmatpush.msra.mxu0 %v1074
      %1616 = vmatpush.msra.mxu0 %v1066
      %1617 = vmatpush.msra.mxu0 %v1058
      %1618 = vmatpush.msra.mxu0 %v1050
      %1619 = vmatpush.msra.mxu0 %v1042
      %1620 = vmatmul.f32.gmra.mxu0 %v830
      %v1621 = vpop.f32.mrf.mxu0
      %v1622 = vadd.f32 %v1602, %v1621
      %1623 = vdwg.mxu0
      %1624 = vmatpush.msra.mxu0 %v1290
      %1625 = vmatpush.msra.mxu0 %v1282
      %1626 = vmatpush.msra.mxu0 %v1274
      %1627 = vmatpush.msra.mxu0 %v1266
      %1628 = vmatpush.msra.mxu0 %v1258
      %1629 = vmatpush.msra.mxu0 %v1250
      %1630 = vmatpush.msra.mxu0 %v1242
      %1631 = vmatpush.msra.mxu0 %v1234
      %1632 = vmatpush.msra.mxu0 %v1226
      %1633 = vmatpush.msra.mxu0 %v1218
      %1634 = vmatpush.msra.mxu0 %v1210
      %1635 = vmatpush.msra.mxu0 %v1202
      %1636 = vmatpush.msra.mxu0 %v1194
      %1637 = vmatpush.msra.mxu0 %v1186
      %1638 = vmatpush.msra.mxu0 %v1178
      %1639 = vmatpush.msra.mxu0 %v1170
      %1640 = vmatmul.f32.gmra.mxu0 %v870
      %v1641 = vpop.f32.mrf.mxu0
      %v1642 = vadd.f32 %v1622, %v1641
      %1643 = vdwg.mxu0
      %1644 = vmatpush.msra.mxu0 %v1418
      %1645 = vmatpush.msra.mxu0 %v1410
      %1646 = vmatpush.msra.mxu0 %v1402
      %1647 = vmatpush.msra.mxu0 %v1394
      %1648 = vmatpush.msra.mxu0 %v1386
      %1649 = vmatpush.msra.mxu0 %v1378
      %1650 = vmatpush.msra.mxu0 %v1370
      %1651 = vmatpush.msra.mxu0 %v1362
      %1652 = vmatpush.msra.mxu0 %v1354
      %1653 = vmatpush.msra.mxu0 %v1346
      %1654 = vmatpush.msra.mxu0 %v1338
      %1655 = vmatpush.msra.mxu0 %v1330
      %1656 = vmatpush.msra.mxu0 %v1322
      %1657 = vmatpush.msra.mxu0 %v1314
      %1658 = vmatpush.msra.mxu0 %v1306
      %1659 = vmatpush.msra.mxu0 %v1298
      %1660 = vmatmul.f32.gmra.mxu0 %v910
      %v1661 = vpop.f32.mrf.mxu0
      %v1662 = vadd.f32 %v1642, %v1661
      %1663 = vdwg.mxu0
      %1664 = vmatpush.msra.mxu0 %v1035
      %1665 = vmatpush.msra.mxu0 %v1027
      %1666 = vmatpush.msra.mxu0 %v1019
      %1667 = vmatpush.msra.mxu0 %v1011
      %1668 = vmatpush.msra.mxu0 %v1003
      %1669 = vmatpush.msra.mxu0 %v995
      %1670 = vmatpush.msra.mxu0 %v987
      %1671 = vmatpush.msra.mxu0 %v979
      %1672 = vmatpush.msra.mxu0 %v971
      %1673 = vmatpush.msra.mxu0 %v963
      %1674 = vmatpush.msra.mxu0 %v955
      %1675 = vmatpush.msra.mxu0 %v947
      %1676 = vmatpush.msra.mxu0 %v939
      %1677 = vmatpush.msra.mxu0 %v931
      %1678 = vmatpush.msra.mxu0 %v923
      %1679 = vmatpush.msra.mxu0 %v915
      %1680 = vmatmul.f32.gmra.mxu0 %v790
      %v1681 = vpop.f32.mrf.mxu0
      %v1682 = vadd.f32 0.0, %v1681
      %1683 = vdwg.mxu0
      %1684 = vmatpush.msra.mxu0 %v1163
      %1685 = vmatpush.msra.mxu0 %v1155
      %1686 = vmatpush.msra.mxu0 %v1147
      %1687 = vmatpush.msra.mxu0 %v1139
      %1688 = vmatpush.msra.mxu0 %v1131
      %1689 = vmatpush.msra.mxu0 %v1123
      %1690 = vmatpush.msra.mxu0 %v1115
      %1691 = vmatpush.msra.mxu0 %v1107
      %1692 = vmatpush.msra.mxu0 %v1099
      %1693 = vmatpush.msra.mxu0 %v1091
      %1694 = vmatpush.msra.mxu0 %v1083
      %1695 = vmatpush.msra.mxu0 %v1075
      %1696 = vmatpush.msra.mxu0 %v1067
      %1697 = vmatpush.msra.mxu0 %v1059
      %1698 = vmatpush.msra.mxu0 %v1051
      %1699 = vmatpush.msra.mxu0 %v1043
      %1700 = vmatmul.f32.gmra.mxu0 %v830
      %v1701 = vpop.f32.mrf.mxu0
      %v1702 = vadd.f32 %v1682, %v1701
      %1703 = vdwg.mxu0
      %1704 = vmatpush.msra.mxu0 %v1291
      %1705 = vmatpush.msra.mxu0 %v1283
      %1706 = vmatpush.msra.mxu0 %v1275
      %1707 = vmatpush.msra.mxu0 %v1267
      %1708 = vmatpush.msra.mxu0 %v1259
      %1709 = vmatpush.msra.mxu0 %v1251
      %1710 = vmatpush.msra.mxu0 %v1243
      %1711 = vmatpush.msra.mxu0 %v1235
      %1712 = vmatpush.msra.mxu0 %v1227
      %1713 = vmatpush.msra.mxu0 %v1219
      %1714 = vmatpush.msra.mxu0 %v1211
      %1715 = vmatpush.msra.mxu0 %v1203
      %1716 = vmatpush.msra.mxu0 %v1195
      %1717 = vmatpush.msra.mxu0 %v1187
      %1718 = vmatpush.msra.mxu0 %v1179
      %1719 = vmatpush.msra.mxu0 %v1171
      %1720 = vmatmul.f32.gmra.mxu0 %v870
      %v1721 = vpop.f32.mrf.mxu0
      %v1722 = vadd.f32 %v1702, %v1721
      %1723 = vdwg.mxu0
      %1724 = vmatpush.msra.mxu0 %v1419
      %1725 = vmatpush.msra.mxu0 %v1411
      %1726 = vmatpush.msra.mxu0 %v1403
      %1727 = vmatpush.msra.mxu0 %v1395
      %1728 = vmatpush.msra.mxu0 %v1387
      %1729 = vmatpush.msra.mxu0 %v1379
      %1730 = vmatpush.msra.mxu0 %v1371
      %1731 = vmatpush.msra.mxu0 %v1363
      %1732 = vmatpush.msra.mxu0 %v1355
      %1733 = vmatpush.msra.mxu0 %v1347
      %1734 = vmatpush.msra.mxu0 %v1339
      %1735 = vmatpush.msra.mxu0 %v1331
      %1736 = vmatpush.msra.mxu0 %v1323
      %1737 = vmatpush.msra.mxu0 %v1315
      %1738 = vmatpush.msra.mxu0 %v1307
      %1739 = vmatpush.msra.mxu0 %v1299
      %1740 = vmatmul.f32.gmra.mxu0 %v910
      %v1741 = vpop.f32.mrf.mxu0
      %v1742 = vadd.f32 %v1722, %v1741
      %1743 = vdwg.mxu0
      %1744 = vmatpush.msra.mxu0 %v1036
      %1745 = vmatpush.msra.mxu0 %v1028
      %1746 = vmatpush.msra.mxu0 %v1020
      %1747 = vmatpush.msra.mxu0 %v1012
      %1748 = vmatpush.msra.mxu0 %v1004
      %1749 = vmatpush.msra.mxu0 %v996
      %1750 = vmatpush.msra.mxu0 %v988
      %1751 = vmatpush.msra.mxu0 %v980
      %1752 = vmatpush.msra.mxu0 %v972
      %1753 = vmatpush.msra.mxu0 %v964
      %1754 = vmatpush.msra.mxu0 %v956
      %1755 = vmatpush.msra.mxu0 %v948
      %1756 = vmatpush.msra.mxu0 %v940
      %1757 = vmatpush.msra.mxu0 %v932
      %1758 = vmatpush.msra.mxu0 %v924
      %1759 = vmatpush.msra.mxu0 %v916
      %1760 = vmatmul.f32.gmra.mxu0 %v790
      %v1761 = vpop.f32.mrf.mxu0
      %v1762 = vadd.f32 0.0, %v1761
      %1763 = vdwg.mxu0
      %1764 = vmatpush.msra.mxu0 %v1164
      %1765 = vmatpush.msra.mxu0 %v1156
      %1766 = vmatpush.msra.mxu0 %v1148
      %1767 = vmatpush.msra.mxu0 %v1140
      %1768 = vmatpush.msra.mxu0 %v1132
      %1769 = vmatpush.msra.mxu0 %v1124
      %1770 = vmatpush.msra.mxu0 %v1116
      %1771 = vmatpush.msra.mxu0 %v1108
      %1772 = vmatpush.msra.mxu0 %v1100
      %1773 = vmatpush.msra.mxu0 %v1092
      %1774 = vmatpush.msra.mxu0 %v1084
      %1775 = vmatpush.msra.mxu0 %v1076
      %1776 = vmatpush.msra.mxu0 %v1068
      %1777 = vmatpush.msra.mxu0 %v1060
      %1778 = vmatpush.msra.mxu0 %v1052
      %1779 = vmatpush.msra.mxu0 %v1044
      %1780 = vmatmul.f32.gmra.mxu0 %v830
      %v1781 = vpop.f32.mrf.mxu0
      %v1782 = vadd.f32 %v1762, %v1781
      %1783 = vdwg.mxu0
      %1784 = vmatpush.msra.mxu0 %v1292
      %1785 = vmatpush.msra.mxu0 %v1284
      %1786 = vmatpush.msra.mxu0 %v1276
      %1787 = vmatpush.msra.mxu0 %v1268
      %1788 = vmatpush.msra.mxu0 %v1260
      %1789 = vmatpush.msra.mxu0 %v1252
      %1790 = vmatpush.msra.mxu0 %v1244
      %1791 = vmatpush.msra.mxu0 %v1236
      %1792 = vmatpush.msra.mxu0 %v1228
      %1793 = vmatpush.msra.mxu0 %v1220
      %1794 = vmatpush.msra.mxu0 %v1212
      %1795 = vmatpush.msra.mxu0 %v1204
      %1796 = vmatpush.msra.mxu0 %v1196
      %1797 = vmatpush.msra.mxu0 %v1188
      %1798 = vmatpush.msra.mxu0 %v1180
      %1799 = vmatpush.msra.mxu0 %v1172
      %1800 = vmatmul.f32.gmra.mxu0 %v870
      %v1801 = vpop.f32.mrf.mxu0
      %v1802 = vadd.f32 %v1782, %v1801
      %1803 = vdwg.mxu0
      %1804 = vmatpush.msra.mxu0 %v1420
      %1805 = vmatpush.msra.mxu0 %v1412
      %1806 = vmatpush.msra.mxu0 %v1404
      %1807 = vmatpush.msra.mxu0 %v1396
      %1808 = vmatpush.msra.mxu0 %v1388
      %1809 = vmatpush.msra.mxu0 %v1380
      %1810 = vmatpush.msra.mxu0 %v1372
      %1811 = vmatpush.msra.mxu0 %v1364
      %1812 = vmatpush.msra.mxu0 %v1356
      %1813 = vmatpush.msra.mxu0 %v1348
      %1814 = vmatpush.msra.mxu0 %v1340
      %1815 = vmatpush.msra.mxu0 %v1332
      %1816 = vmatpush.msra.mxu0 %v1324
      %1817 = vmatpush.msra.mxu0 %v1316
      %1818 = vmatpush.msra.mxu0 %v1308
      %1819 = vmatpush.msra.mxu0 %v1300
      %1820 = vmatmul.f32.gmra.mxu0 %v910
      %v1821 = vpop.f32.mrf.mxu0
      %v1822 = vadd.f32 %v1802, %v1821
      %1823 = vdwg.mxu0
      %1824 = vmatpush.msra.mxu0 %v1037
      %1825 = vmatpush.msra.mxu0 %v1029
      %1826 = vmatpush.msra.mxu0 %v1021
      %1827 = vmatpush.msra.mxu0 %v1013
      %1828 = vmatpush.msra.mxu0 %v1005
      %1829 = vmatpush.msra.mxu0 %v997
      %1830 = vmatpush.msra.mxu0 %v989
      %1831 = vmatpush.msra.mxu0 %v981
      %1832 = vmatpush.msra.mxu0 %v973
      %1833 = vmatpush.msra.mxu0 %v965
      %1834 = vmatpush.msra.mxu0 %v957
      %1835 = vmatpush.msra.mxu0 %v949
      %1836 = vmatpush.msra.mxu0 %v941
      %1837 = vmatpush.msra.mxu0 %v933
      %1838 = vmatpush.msra.mxu0 %v925
      %1839 = vmatpush.msra.mxu0 %v917
      %1840 = vmatmul.f32.gmra.mxu0 %v790
      %v1841 = vpop.f32.mrf.mxu0
      %v1842 = vadd.f32 0.0, %v1841
      %1843 = vdwg.mxu0
      %1844 = vmatpush.msra.mxu0 %v1165
      %1845 = vmatpush.msra.mxu0 %v1157
      %1846 = vmatpush.msra.mxu0 %v1149
      %1847 = vmatpush.msra.mxu0 %v1141
      %1848 = vmatpush.msra.mxu0 %v1133
      %1849 = vmatpush.msra.mxu0 %v1125
      %1850 = vmatpush.msra.mxu0 %v1117
      %1851 = vmatpush.msra.mxu0 %v1109
      %1852 = vmatpush.msra.mxu0 %v1101
      %1853 = vmatpush.msra.mxu0 %v1093
      %1854 = vmatpush.msra.mxu0 %v1085
      %1855 = vmatpush.msra.mxu0 %v1077
      %1856 = vmatpush.msra.mxu0 %v1069
      %1857 = vmatpush.msra.mxu0 %v1061
      %1858 = vmatpush.msra.mxu0 %v1053
      %1859 = vmatpush.msra.mxu0 %v1045
      %1860 = vmatmul.f32.gmra.mxu0 %v830
      %v1861 = vpop.f32.mrf.mxu0
      %v1862 = vadd.f32 %v1842, %v1861
      %1863 = vdwg.mxu0
      %1864 = vmatpush.msra.mxu0 %v1293
      %1865 = vmatpush.msra.mxu0 %v1285
      %1866 = vmatpush.msra.mxu0 %v1277
      %1867 = vmatpush.msra.mxu0 %v1269
      %1868 = vmatpush.msra.mxu0 %v1261
      %1869 = vmatpush.msra.mxu0 %v1253
      %1870 = vmatpush.msra.mxu0 %v1245
      %1871 = vmatpush.msra.mxu0 %v1237
      %1872 = vmatpush.msra.mxu0 %v1229
      %1873 = vmatpush.msra.mxu0 %v1221
      %1874 = vmatpush.msra.mxu0 %v1213
      %1875 = vmatpush.msra.mxu0 %v1205
      %1876 = vmatpush.msra.mxu0 %v1197
      %1877 = vmatpush.msra.mxu0 %v1189
      %1878 = vmatpush.msra.mxu0 %v1181
      %1879 = vmatpush.msra.mxu0 %v1173
      %1880 = vmatmul.f32.gmra.mxu0 %v870
      %v1881 = vpop.f32.mrf.mxu0
      %v1882 = vadd.f32 %v1862, %v1881
      %1883 = vdwg.mxu0
      %1884 = vmatpush.msra.mxu0 %v1421
      %1885 = vmatpush.msra.mxu0 %v1413
      %1886 = vmatpush.msra.mxu0 %v1405
      %1887 = vmatpush.msra.mxu0 %v1397
      %1888 = vmatpush.msra.mxu0 %v1389
      %1889 = vmatpush.msra.mxu0 %v1381
      %1890 = vmatpush.msra.mxu0 %v1373
      %1891 = vmatpush.msra.mxu0 %v1365
      %1892 = vmatpush.msra.mxu0 %v1357
      %1893 = vmatpush.msra.mxu0 %v1349
      %1894 = vmatpush.msra.mxu0 %v1341
      %1895 = vmatpush.msra.mxu0 %v1333
      %1896 = vmatpush.msra.mxu0 %v1325
      %1897 = vmatpush.msra.mxu0 %v1317
      %1898 = vmatpush.msra.mxu0 %v1309
      %1899 = vmatpush.msra.mxu0 %v1301
      %1900 = vmatmul.f32.gmra.mxu0 %v910
      %v1901 = vpop.f32.mrf.mxu0
      %v1902 = vadd.f32 %v1882, %v1901
      %1903 = vdwg.mxu0
      %1904 = vmatpush.msra.mxu0 %v1038
      %1905 = vmatpush.msra.mxu0 %v1030
      %1906 = vmatpush.msra.mxu0 %v1022
      %1907 = vmatpush.msra.mxu0 %v1014
      %1908 = vmatpush.msra.mxu0 %v1006
      %1909 = vmatpush.msra.mxu0 %v998
      %1910 = vmatpush.msra.mxu0 %v990
      %1911 = vmatpush.msra.mxu0 %v982
      %1912 = vmatpush.msra.mxu0 %v974
      %1913 = vmatpush.msra.mxu0 %v966
      %1914 = vmatpush.msra.mxu0 %v958
      %1915 = vmatpush.msra.mxu0 %v950
      %1916 = vmatpush.msra.mxu0 %v942
      %1917 = vmatpush.msra.mxu0 %v934
      %1918 = vmatpush.msra.mxu0 %v926
      %1919 = vmatpush.msra.mxu0 %v918
      %1920 = vmatmul.f32.gmra.mxu0 %v790
      %v1921 = vpop.f32.mrf.mxu0
      %v1922 = vadd.f32 0.0, %v1921
      %1923 = vdwg.mxu0
      %1924 = vmatpush.msra.mxu0 %v1166
      %1925 = vmatpush.msra.mxu0 %v1158
      %1926 = vmatpush.msra.mxu0 %v1150
      %1927 = vmatpush.msra.mxu0 %v1142
      %1928 = vmatpush.msra.mxu0 %v1134
      %1929 = vmatpush.msra.mxu0 %v1126
      %1930 = vmatpush.msra.mxu0 %v1118
      %1931 = vmatpush.msra.mxu0 %v1110
      %1932 = vmatpush.msra.mxu0 %v1102
      %1933 = vmatpush.msra.mxu0 %v1094
      %1934 = vmatpush.msra.mxu0 %v1086
      %1935 = vmatpush.msra.mxu0 %v1078
      %1936 = vmatpush.msra.mxu0 %v1070
      %1937 = vmatpush.msra.mxu0 %v1062
      %1938 = vmatpush.msra.mxu0 %v1054
      %1939 = vmatpush.msra.mxu0 %v1046
      %1940 = vmatmul.f32.gmra.mxu0 %v830
      %v1941 = vpop.f32.mrf.mxu0
      %v1942 = vadd.f32 %v1922, %v1941
      %1943 = vdwg.mxu0
      %1944 = vmatpush.msra.mxu0 %v1294
      %1945 = vmatpush.msra.mxu0 %v1286
      %1946 = vmatpush.msra.mxu0 %v1278
      %1947 = vmatpush.msra.mxu0 %v1270
      %1948 = vmatpush.msra.mxu0 %v1262
      %1949 = vmatpush.msra.mxu0 %v1254
      %1950 = vmatpush.msra.mxu0 %v1246
      %1951 = vmatpush.msra.mxu0 %v1238
      %1952 = vmatpush.msra.mxu0 %v1230
      %1953 = vmatpush.msra.mxu0 %v1222
      %1954 = vmatpush.msra.mxu0 %v1214
      %1955 = vmatpush.msra.mxu0 %v1206
      %1956 = vmatpush.msra.mxu0 %v1198
      %1957 = vmatpush.msra.mxu0 %v1190
      %1958 = vmatpush.msra.mxu0 %v1182
      %1959 = vmatpush.msra.mxu0 %v1174
      %1960 = vmatmul.f32.gmra.mxu0 %v870
      %v1961 = vpop.f32.mrf.mxu0
      %v1962 = vadd.f32 %v1942, %v1961
      %1963 = vdwg.mxu0
      %1964 = vmatpush.msra.mxu0 %v1422
      %1965 = vmatpush.msra.mxu0 %v1414
      %1966 = vmatpush.msra.mxu0 %v1406
      %1967 = vmatpush.msra.mxu0 %v1398
      %1968 = vmatpush.msra.mxu0 %v1390
      %1969 = vmatpush.msra.mxu0 %v1382
      %1970 = vmatpush.msra.mxu0 %v1374
      %1971 = vmatpush.msra.mxu0 %v1366
      %1972 = vmatpush.msra.mxu0 %v1358
      %1973 = vmatpush.msra.mxu0 %v1350
      %1974 = vmatpush.msra.mxu0 %v1342
      %1975 = vmatpush.msra.mxu0 %v1334
      %1976 = vmatpush.msra.mxu0 %v1326
      %1977 = vmatpush.msra.mxu0 %v1318
      %1978 = vmatpush.msra.mxu0 %v1310
      %1979 = vmatpush.msra.mxu0 %v1302
      %1980 = vmatmul.f32.gmra.mxu0 %v910
      %v1981 = vpop.f32.mrf.mxu0
      %v1982 = vadd.f32 %v1962, %v1981
      %1983 = vdwg.mxu0
      %1984 = vmatpush.msra.mxu0 %v1039
      %1985 = vmatpush.msra.mxu0 %v1031
      %1986 = vmatpush.msra.mxu0 %v1023
      %1987 = vmatpush.msra.mxu0 %v1015
      %1988 = vmatpush.msra.mxu0 %v1007
      %1989 = vmatpush.msra.mxu0 %v999
      %1990 = vmatpush.msra.mxu0 %v991
      %1991 = vmatpush.msra.mxu0 %v983
      %1992 = vmatpush.msra.mxu0 %v975
      %1993 = vmatpush.msra.mxu0 %v967
      %1994 = vmatpush.msra.mxu0 %v959
      %1995 = vmatpush.msra.mxu0 %v951
      %1996 = vmatpush.msra.mxu0 %v943
      %1997 = vmatpush.msra.mxu0 %v935
      %1998 = vmatpush.msra.mxu0 %v927
      %1999 = vmatpush.msra.mxu0 %v919
      %2000 = vmatmul.f32.gmra.mxu0 %v790
      %v2001 = vpop.f32.mrf.mxu0
      %v2002 = vadd.f32 0.0, %v2001
      %2003 = vdwg.mxu0
      %2004 = vmatpush.msra.mxu0 %v1167
      %2005 = vmatpush.msra.mxu0 %v1159
      %2006 = vmatpush.msra.mxu0 %v1151
      %2007 = vmatpush.msra.mxu0 %v1143
      %2008 = vmatpush.msra.mxu0 %v1135
      %2009 = vmatpush.msra.mxu0 %v1127
      %2010 = vmatpush.msra.mxu0 %v1119
      %2011 = vmatpush.msra.mxu0 %v1111
      %2012 = vmatpush.msra.mxu0 %v1103
      %2013 = vmatpush.msra.mxu0 %v1095
      %2014 = vmatpush.msra.mxu0 %v1087
      %2015 = vmatpush.msra.mxu0 %v1079
      %2016 = vmatpush.msra.mxu0 %v1071
      %2017 = vmatpush.msra.mxu0 %v1063
      %2018 = vmatpush.msra.mxu0 %v1055
      %2019 = vmatpush.msra.mxu0 %v1047
      %2020 = vmatmul.f32.gmra.mxu0 %v830
      %v2021 = vpop.f32.mrf.mxu0
      %v2022 = vadd.f32 %v2002, %v2021
      %2023 = vdwg.mxu0
      %2024 = vmatpush.msra.mxu0 %v1295
      %2025 = vmatpush.msra.mxu0 %v1287
      %2026 = vmatpush.msra.mxu0 %v1279
      %2027 = vmatpush.msra.mxu0 %v1271
      %2028 = vmatpush.msra.mxu0 %v1263
      %2029 = vmatpush.msra.mxu0 %v1255
      %2030 = vmatpush.msra.mxu0 %v1247
      %2031 = vmatpush.msra.mxu0 %v1239
      %2032 = vmatpush.msra.mxu0 %v1231
      %2033 = vmatpush.msra.mxu0 %v1223
      %2034 = vmatpush.msra.mxu0 %v1215
      %2035 = vmatpush.msra.mxu0 %v1207
      %2036 = vmatpush.msra.mxu0 %v1199
      %2037 = vmatpush.msra.mxu0 %v1191
      %2038 = vmatpush.msra.mxu0 %v1183
      %2039 = vmatpush.msra.mxu0 %v1175
      %2040 = vmatmul.f32.gmra.mxu0 %v870
      %v2041 = vpop.f32.mrf.mxu0
      %v2042 = vadd.f32 %v2022, %v2041
      %2043 = vdwg.mxu0
      %2044 = vmatpush.msra.mxu0 %v1423
      %2045 = vmatpush.msra.mxu0 %v1415
      %2046 = vmatpush.msra.mxu0 %v1407
      %2047 = vmatpush.msra.mxu0 %v1399
      %2048 = vmatpush.msra.mxu0 %v1391
      %2049 = vmatpush.msra.mxu0 %v1383
      %2050 = vmatpush.msra.mxu0 %v1375
      %2051 = vmatpush.msra.mxu0 %v1367
      %2052 = vmatpush.msra.mxu0 %v1359
      %2053 = vmatpush.msra.mxu0 %v1351
      %2054 = vmatpush.msra.mxu0 %v1343
      %2055 = vmatpush.msra.mxu0 %v1335
      %2056 = vmatpush.msra.mxu0 %v1327
      %2057 = vmatpush.msra.mxu0 %v1319
      %2058 = vmatpush.msra.mxu0 %v1311
      %2059 = vmatpush.msra.mxu0 %v1303
      %2060 = vmatmul.f32.gmra.mxu0 %v910
      %v2061 = vpop.f32.mrf.mxu0
      %v2062 = vadd.f32 %v2042, %v2061
      %2063 = vdwg.mxu0
      %2064 = vst [vmem:[%s278] sm:$0x1f] %v1502
      %2065 = vst [vmem:[%s278 + $0x8] sm:$0x1f] %v1582
      %2066 = vst [vmem:[%s278 + $0x10] sm:$0x1f] %v1662
      %2067 = vst [vmem:[%s278 + $0x18] sm:$0x1f] %v1742
      %2068 = vst [vmem:[%s278 + $0x20] sm:$0x1f] %v1822
      %2069 = vst [vmem:[%s278 + $0x28] sm:$0x1f] %v1902
      %2070 = vst [vmem:[%s278 + $0x30] sm:$0x1f] %v1982
      %2071 = vst [vmem:[%s278 + $0x38] sm:$0x1f] %v2062
      %p2072 = scmp.lt.s32.totalorder %s18, 1
      %s2073 = scalar_select %p2072, %s18, 1
      %s2074 = smul.addr %s2073, 8
      %s2075 = smul.addr %s2074, 8
      %s2076 = scalar_lea.vmem %s7, %s2075
      // Predicated region
      $region49: #{head_forward.1} parent=47 // pred_check
        %p2077 = pneg %p188
      $region50: #{head_forward.1} parent=47 // pred_check_branch
        %2079 = sbr.rel (%p2077) target = $region52
      $region51: #{head_forward.1} parent=47 // pred_region
        _
      $region52: #{head_forward.1} parent=47 // pred_fallthru
        _
    $region48: #{head_forward.1} parent=5 // pred_fallthru
      _
    %p2080 = scmp.le.s32.totalorder 2, %s13
    // Predicated region
    $region53: #{head_forward.1} parent=5 // pred_check
      %p2081 = pneg %p2080
    $region54: #{head_forward.1} parent=5 // pred_check_branch
      %2083 = sbr.rel (%p2081) target = $region56
    $region55: #{head_forward.1} parent=5 // pred_region
      %s2084 = ssub.s32 %s13, 2
      // Predicated region
      $region57: #{head_forward.1} parent=55 // pred_check
        %p2085 = pneg %p194
      $region58: #{head_forward.1} parent=55 // pred_check_branch
        %2087 = sbr.rel (%p2085) target = $region60
      $region59: #{head_forward.1} parent=55 // pred_region
        %p2088 = scmp.lt.s32.totalorder %s19, 1
        %s2089 = scalar_select %p2088, %s19, 1
        %s2090 = smul.addr %s2089, 8
        %s2091 = smul.addr %s2090, 8
        %s2092 = scalar_lea.vmem %s7, %s2091
      $region60: #{head_forward.1} parent=55 // pred_fallthru
        _
    $region56: #{head_forward.1} parent=5 // pred_fallthru
      _
  $region6: #{head_forward.1} parent=0 // loop_footer
    %s17 = sadd.s32 1, %s13
  $region7: #{head_forward.1} parent=0 // loop_footer_branch
    %12 = sbr.rel target = $region3
  $region8: #{head_forward.1} parent=0 // loop_exit
    _

</llo_original>
